<compile_context>
chip_gen: v7x
topology: tpu7x:2x2x1
jax: 0.10.0
libtpu: 0.0.40
codegen_flags: <defaults>
</compile_context>

<pallas_src>
import jax
import jax.numpy as jnp
from jax.experimental import pallas as pl
from jax.experimental.pallas import tpu as pltpu

LN_EPS = 1e-5


def _layernorm(v, gamma, beta):
    mu = jnp.mean(v, axis=-1, keepdims=True)
    var = jnp.mean((v - mu) ** 2, axis=-1, keepdims=True)
    return (v - mu) * jax.lax.rsqrt(var + LN_EPS) * gamma + beta


def make_vit_encoder_kernel(num_layers: int, num_heads: int):
    def kernel(x_ref,
               ln1g_ref, ln1b_ref,
               wqkv_ref, bqkv_ref, wo_ref, bo_ref,
               ln2g_ref, ln2b_ref,
               w1_ref, b1_ref, w2_ref, b2_ref,
               y_ref, attn_ref,
               act_ref, ctx_ref):
        l = pl.program_id(1)

        # Load the input activation from HBM only at layer 0; afterwards the
        # activation lives in the VMEM scratch across the inner (layer) axis.
        @pl.when(l == 0)
        def _():
            act_ref[...] = x_ref[0]

        x = act_ref[...]                                   # (N, E) f32
        N, E = x.shape
        H = num_heads
        Dh = E // H
        scale = 1.0 / (Dh ** 0.5)

        # ---- LayerNorm 1 (f32) ----
        xn = _layernorm(x, ln1g_ref[0], ln1b_ref[0]).astype(jnp.bfloat16)

        # ---- fused QKV projection: one MXU matmul, f32 bias add, one bf16 cast ----
        qkv = (jnp.dot(xn, wqkv_ref[0], preferred_element_type=jnp.float32)
               + bqkv_ref[0]).astype(jnp.bfloat16)          # (N, 3E)

        attn_sum = jnp.zeros((N, N), dtype=jnp.float32)
        # TODO(synk): for H > 4 use lax.fori_loop + (H,N,Dh) staging scratch instead
        # of a static Python unroll (bounds per-head live ranges / vreg spills).
        for h in range(H):
            qh = qkv[:, h * Dh:(h + 1) * Dh]                # (N, Dh) bf16
            kh = qkv[:, E + h * Dh:E + (h + 1) * Dh]
            vh = qkv[:, 2 * E + h * Dh:2 * E + (h + 1) * Dh]

            # scores = qh @ kh^T via last-dim/last-dim contraction (no XLU transpose)
            s = jax.lax.dot_general(
                qh, kh, (((1,), (1,)), ((), ())),
                preferred_element_type=jnp.float32) * scale  # (N, N) f32
            s = s - jnp.max(s, axis=-1, keepdims=True)
            p = jnp.exp(s)
            # exact normalization: p is also returned as the attention weights
            p = p * (1.0 / jnp.sum(p, axis=-1, keepdims=True))
            attn_sum = attn_sum + p

            ctx_h = jnp.dot(p.astype(jnp.bfloat16), vh,
                            preferred_element_type=jnp.float32)   # (N, Dh) f32
            ctx_ref[:, h * Dh:(h + 1) * Dh] = ctx_h.astype(jnp.bfloat16)

        # ---- single K=E output projection ----
        attn_out = jnp.dot(ctx_ref[...], wo_ref[0],
                           preferred_element_type=jnp.float32) + bo_ref[0]

        # ---- residual 1 ----
        x1 = x + attn_out

        # ---- LayerNorm 2 + FeedForward (ReLU) ----
        xn2 = _layernorm(x1, ln2g_ref[0], ln2b_ref[0]).astype(jnp.bfloat16)
        h1 = jnp.maximum(jnp.dot(xn2, w1_ref[0], preferred_element_type=jnp.float32)
                         + b1_ref[0], 0.0).astype(jnp.bfloat16)   # fused ReLU + cast
        ff = jnp.dot(h1, w2_ref[0], preferred_element_type=jnp.float32) + b2_ref[0]

        # ---- residual 2: carry activation to the next layer in VMEM ----
        y = x1 + ff
        act_ref[...] = y

        # Only the final layer writes the outputs back to HBM.
        @pl.when(l == num_layers - 1)
        def _():
            y_ref[0] = y.astype(y_ref.dtype)
            attn_ref[0] = (attn_sum * (1.0 / H)).astype(attn_ref.dtype)

    return kernel


def vit_encoder(x, packed, num_layers, num_heads):
    """ViTEncoder forward. x: (B, N, E) f32; packed: stacked per-layer params.

    Returns (y, attn_weights_of_last_layer) with shapes (B,N,E) / (B,N,N)."""
    B, N, E = x.shape

    order = ("ln1_g", "ln1_b", "wqkv", "bqkv", "wo", "bo",
             "ln2_g", "ln2_b", "w1", "b1", "w2", "b2")
    weight_args = [packed[k] for k in order]

    def wspec(arr):
        # stacked weights: block is one layer's slice, indexed by the inner grid axis
        return pl.BlockSpec((1,) + arr.shape[1:], lambda b, l: (l, 0, 0))

    in_specs = ([pl.BlockSpec((1, N, E), lambda b, l: (b, 0, 0))]
                + [wspec(a) for a in weight_args])

    out_shape = (jax.ShapeDtypeStruct((B, N, E), jnp.float32),
                 jax.ShapeDtypeStruct((B, N, N), jnp.float32))
    out_specs = (pl.BlockSpec((1, N, E), lambda b, l: (b, 0, 0)),
                 pl.BlockSpec((1, N, N), lambda b, l: (b, 0, 0)))

    y, attn = pl.pallas_call(
        make_vit_encoder_kernel(num_layers, num_heads),
        out_shape=out_shape,
        grid=(B, num_layers),
        in_specs=in_specs,
        out_specs=out_specs,
        scratch_shapes=[pltpu.VMEM((N, E), jnp.float32),     # resident activation
                        pltpu.VMEM((N, E), jnp.bfloat16)],   # per-head context staging
        compiler_params=pltpu.CompilerParams(
            dimension_semantics=("parallel", "arbitrary"),
            vmem_limit_bytes=48 * 1024 * 1024),
    )(x, *weight_args)
    return y, attn


def init_layer_params(key, embed_dim, ff_dim):
    """f32 per-layer parameters (also used by the pure-JAX reference)."""
    keys = jax.random.split(key, 12)
    s = 0.05

    def lin(k, din, dout):
        kw, kb = jax.random.split(k)
        return (jax.random.normal(kw, (din, dout), jnp.float32) * s,
                jax.random.normal(kb, (dout,), jnp.float32) * s)

    wq, bq = lin(keys[0], embed_dim, embed_dim)
    wk, bk = lin(keys[1], embed_dim, embed_dim)
    wv, bv = lin(keys[2], embed_dim, embed_dim)
    wo, bo = lin(keys[3], embed_dim, embed_dim)
    w1, b1 = lin(keys[4], embed_dim, ff_dim)
    w2, b2 = lin(keys[5], ff_dim, embed_dim)
    ln1_g = jnp.ones((embed_dim,), jnp.float32) + 0.01 * jax.random.normal(keys[6], (embed_dim,))
    ln1_b = 0.01 * jax.random.normal(keys[7], (embed_dim,))
    ln2_g = jnp.ones((embed_dim,), jnp.float32) + 0.01 * jax.random.normal(keys[8], (embed_dim,))
    ln2_b = 0.01 * jax.random.normal(keys[9], (embed_dim,))
    r2 = lambda a: a.reshape(1, -1)   # biases / LN params as (1, D) for 2-D layouts
    return {
        "wq": wq, "bq": r2(bq), "wk": wk, "bk": r2(bk),
        "wv": wv, "bv": r2(bv), "wo": wo, "bo": r2(bo),
        "w1": w1, "b1": r2(b1), "w2": w2, "b2": r2(b2),
        "ln1_g": r2(ln1_g), "ln1_b": r2(ln1_b),
        "ln2_g": r2(ln2_g), "ln2_b": r2(ln2_b),
    }


def pack_params(params_f32):
    """Stack per-layer params on a leading L axis, fuse QKV, cast MXU weights to bf16."""
    def stack(key, dtype=None):
        a = jnp.stack([p[key] for p in params_f32], axis=0)
        return a.astype(dtype) if dtype is not None else a

    wqkv = jnp.stack([jnp.concatenate([p["wq"], p["wk"], p["wv"]], axis=-1)
                      for p in params_f32], axis=0).astype(jnp.bfloat16)   # (L, E, 3E)
    bqkv = jnp.stack([jnp.concatenate([p["bq"], p["bk"], p["bv"]], axis=-1)
                      for p in params_f32], axis=0)                        # (L, 1, 3E) f32
    return {
        "ln1_g": stack("ln1_g"), "ln1_b": stack("ln1_b"),
        "wqkv": wqkv, "bqkv": bqkv,
        "wo": stack("wo", jnp.bfloat16), "bo": stack("bo"),
        "ln2_g": stack("ln2_g"), "ln2_b": stack("ln2_b"),
        "w1": stack("w1", jnp.bfloat16), "b1": stack("b1"),
        "w2": stack("w2", jnp.bfloat16), "b2": stack("b2"),
    }


# ---- pure-JAX f32 reference for sanity checking ----
def ref_layer(x, p, num_heads):
    B, N, E = x.shape
    H, Dh = num_heads, E // num_heads

    def ln(v, g, b):
        mu = v.mean(-1, keepdims=True)
        var = ((v - mu) ** 2).mean(-1, keepdims=True)
        return (v - mu) / jnp.sqrt(var + LN_EPS) * g + b

    xn = ln(x, p["ln1_g"][0], p["ln1_b"][0])
    q = xn @ p["wq"] + p["bq"][0]
    k = xn @ p["wk"] + p["bk"][0]
    v = xn @ p["wv"] + p["bv"][0]
    qh = q.reshape(B, N, H, Dh).transpose(0, 2, 1, 3)
    kh = k.reshape(B, N, H, Dh).transpose(0, 2, 1, 3)
    vh = v.reshape(B, N, H, Dh).transpose(0, 2, 1, 3)
    scores = jnp.einsum("bhnd,bhmd->bhnm", qh, kh) / (Dh ** 0.5)
    attn = jax.nn.softmax(scores, axis=-1)
    ctx = jnp.einsum("bhnm,bhmd->bhnd", attn, vh).transpose(0, 2, 1, 3).reshape(B, N, E)
    attn_out = ctx @ p["wo"] + p["bo"][0]
    x1 = x + attn_out
    xn2 = ln(x1, p["ln2_g"][0], p["ln2_b"][0])
    ff = jnp.maximum(xn2 @ p["w1"] + p["b1"][0], 0.0) @ p["w2"] + p["b2"][0]
    return x1 + ff, attn.mean(axis=1)


if __name__ == "__main__":
    # Small config consistent with the module: num_layers=2, num_heads=4,
    # embed_dim=32, ff_dim=64, seq N=8, batch B=2.
    B, N, E, F, H, L = 2, 8, 32, 64, 4, 2

    key = jax.random.PRNGKey(0)
    kx, kp = jax.random.split(key)
    x = jax.random.normal(kx, (B, N, E), jnp.float32)

    layer_keys = jax.random.split(kp, L)
    params_f32 = [init_layer_params(k, E, F) for k in layer_keys]
    packed = pack_params(params_f32)

    y, attn = vit_encoder(x, packed, L, H)
    y = jax.block_until_ready(y)
    attn = jax.block_until_ready(attn)

    # sanity check vs pure-JAX f32 reference (tolerance loosened: kernel uses
    # bf16 MXU operands with f32 accumulation)
    xr, ar = x, None
    for p in params_f32:
        xr, ar = ref_layer(xr, p, H)
    assert y.shape == (B, N, E) and attn.shape == (B, N, N)
    assert jnp.allclose(y, xr, atol=3e-2, rtol=3e-2), "output mismatch"
    assert jnp.allclose(attn, ar, atol=3e-2, rtol=3e-2), "attn mismatch"

    print("KERNEL_OK")
</pallas_src>

<mosaic_0001>
module attributes {stable_mosaic.version = 11 : i64} {
  func.func @kernel(%arg0: i32, %arg1: i32, %arg2: memref<1x8x32xf32, #tpu.memory_space<vmem>>, %arg3: memref<1x1x32xf32, #tpu.memory_space<vmem>>, %arg4: memref<1x1x32xf32, #tpu.memory_space<vmem>>, %arg5: memref<1x32x96xbf16, #tpu.memory_space<vmem>>, %arg6: memref<1x1x96xf32, #tpu.memory_space<vmem>>, %arg7: memref<1x32x32xbf16, #tpu.memory_space<vmem>>, %arg8: memref<1x1x32xf32, #tpu.memory_space<vmem>>, %arg9: memref<1x1x32xf32, #tpu.memory_space<vmem>>, %arg10: memref<1x1x32xf32, #tpu.memory_space<vmem>>, %arg11: memref<1x32x64xbf16, #tpu.memory_space<vmem>>, %arg12: memref<1x1x64xf32, #tpu.memory_space<vmem>>, %arg13: memref<1x64x32xbf16, #tpu.memory_space<vmem>>, %arg14: memref<1x1x32xf32, #tpu.memory_space<vmem>>, %arg15: memref<1x8x32xf32, #tpu.memory_space<vmem>>, %arg16: memref<1x8x8xf32, #tpu.memory_space<vmem>>, %arg17: memref<8x32xf32, #tpu.memory_space<vmem>>, %arg18: memref<8x32xbf16, #tpu.memory_space<vmem>>) attributes {dimension_semantics = [#tpu.dimension_semantics<parallel>, #tpu.dimension_semantics<arbitrary>], iteration_bounds = array<i64: 2, 2>, scalar_prefetch = 0 : i64, scratch_operands = 2 : i64, tpu.core_type = #tpu.core_type<tc>, window_params = [{transform_indices = @transform_0, window_bounds = array<i64: 1, 8, 32>}, {transform_indices = @transform_1, window_bounds = array<i64: 1, 1, 32>}, {transform_indices = @transform_2, window_bounds = array<i64: 1, 1, 32>}, {transform_indices = @transform_3, window_bounds = array<i64: 1, 32, 96>}, {transform_indices = @transform_4, window_bounds = array<i64: 1, 1, 96>}, {transform_indices = @transform_5, window_bounds = array<i64: 1, 32, 32>}, {transform_indices = @transform_6, window_bounds = array<i64: 1, 1, 32>}, {transform_indices = @transform_7, window_bounds = array<i64: 1, 1, 32>}, {transform_indices = @transform_8, window_bounds = array<i64: 1, 1, 32>}, {transform_indices = @transform_9, window_bounds = array<i64: 1, 32, 64>}, {transform_indices = @transform_10, window_bounds = array<i64: 1, 1, 64>}, {transform_indices = @transform_11, window_bounds = array<i64: 1, 64, 32>}, {transform_indices = @transform_12, window_bounds = array<i64: 1, 1, 32>}, {transform_indices = @transform_13, window_bounds = array<i64: 1, 8, 32>}, {transform_indices = @transform_14, window_bounds = array<i64: 1, 8, 8>}]} {
    %c0_i32 = arith.constant 0 : i32
    %0 = arith.cmpi eq, %arg1, %c0_i32 : i32
    %1 = arith.extui %0 : i1 to i32
    %c0_i32_0 = arith.constant 0 : i32
    %2 = arith.cmpi ne, %1, %c0_i32_0 : i32
    scf.if %2 {
      %c0_87 = arith.constant 0 : index
      %c0_88 = arith.constant 0 : index
      %c0_89 = arith.constant 0 : index
      %186 = vector.load %arg2[%c0_87, %c0_88, %c0_89] : memref<1x8x32xf32, #tpu.memory_space<vmem>>, vector<1x8x32xf32>
      %187 = vector.shape_cast %186 : vector<1x8x32xf32> to vector<8x32xf32>
      %c0_90 = arith.constant 0 : index
      %c0_91 = arith.constant 0 : index
      %188 = vector.load %arg17[%c0_90, %c0_91] : memref<8x32xf32, #tpu.memory_space<vmem>>, vector<8x32xf32>
      tpu.vector_store %arg17[%c0_90, %c0_91], %187 {strides = array<i32>} : memref<8x32xf32, #tpu.memory_space<vmem>>, vector<8x32xf32>,
    } else {
    }
    %c0 = arith.constant 0 : index
    %c0_1 = arith.constant 0 : index
    %3 = vector.load %arg17[%c0, %c0_1] : memref<8x32xf32, #tpu.memory_space<vmem>>, vector<8x32xf32>
    %c0_2 = arith.constant 0 : index
    %c0_3 = arith.constant 0 : index
    %c0_4 = arith.constant 0 : index
    %4 = vector.load %arg3[%c0_2, %c0_3, %c0_4] : memref<1x1x32xf32, #tpu.memory_space<vmem>>, vector<1x1x32xf32>
    %5 = vector.shape_cast %4 : vector<1x1x32xf32> to vector<1x32xf32>
    %c0_5 = arith.constant 0 : index
    %c0_6 = arith.constant 0 : index
    %c0_7 = arith.constant 0 : index
    %6 = vector.load %arg4[%c0_5, %c0_6, %c0_7] : memref<1x1x32xf32, #tpu.memory_space<vmem>>, vector<1x1x32xf32>
    %7 = vector.shape_cast %6 : vector<1x1x32xf32> to vector<1x32xf32>
    %cst = arith.constant dense<0.000000e+00> : vector<8xf32>
    %8 = vector.multi_reduction <add>, %3, %cst [1] : vector<8x32xf32> to vector<8xf32>
    %9 = vector.shape_cast %8 : vector<8xf32> to vector<8x1xf32>
    %cst_8 = arith.constant 3.200000e+01 : f32
    %10 = vector.broadcast %cst_8 : f32 to vector<8x1xf32>
    %11 = arith.divf %9, %10 : vector<8x1xf32>
    %12 = vector.broadcast %11 : vector<8x1xf32> to vector<8x32xf32>
    %13 = arith.subf %3, %12 : vector<8x32xf32>
    %14 = arith.mulf %13, %13 : vector<8x32xf32>
    %cst_9 = arith.constant dense<0.000000e+00> : vector<8xf32>
    %15 = vector.multi_reduction <add>, %14, %cst_9 [1] : vector<8x32xf32> to vector<8xf32>
    %16 = vector.shape_cast %15 : vector<8xf32> to vector<8x1xf32>
    %cst_10 = arith.constant 3.200000e+01 : f32
    %17 = vector.broadcast %cst_10 : f32 to vector<8x1xf32>
    %18 = arith.divf %16, %17 : vector<8x1xf32>
    %19 = vector.broadcast %11 : vector<8x1xf32> to vector<8x32xf32>
    %20 = arith.subf %3, %19 : vector<8x32xf32>
    %cst_11 = arith.constant 9.99999974E-6 : f32
    %21 = vector.broadcast %cst_11 : f32 to vector<8x1xf32>
    %22 = arith.addf %18, %21 : vector<8x1xf32>
    %23 = math.rsqrt %22 : vector<8x1xf32>
    %24 = vector.broadcast %23 : vector<8x1xf32> to vector<8x32xf32>
    %25 = arith.mulf %20, %24 : vector<8x32xf32>
    %26 = vector.broadcast %5 : vector<1x32xf32> to vector<8x32xf32>
    %27 = arith.mulf %25, %26 : vector<8x32xf32>
    %28 = vector.broadcast %7 : vector<1x32xf32> to vector<8x32xf32>
    %29 = arith.addf %27, %28 : vector<8x32xf32>
    %30 = arith.truncf %29 : vector<8x32xf32> to vector<8x32xbf16>
    %c0_12 = arith.constant 0 : index
    %c0_13 = arith.constant 0 : index
    %c0_14 = arith.constant 0 : index
    %31 = vector.load %arg5[%c0_12, %c0_13, %c0_14] : memref<1x32x96xbf16, #tpu.memory_space<vmem>>, vector<1x32x96xbf16>
    %32 = vector.shape_cast %31 : vector<1x32x96xbf16> to vector<32x96xbf16>
    %cst_15 = arith.constant dense<0.000000e+00> : vector<8x96xf32>
    %33 = tpu.matmul %30, %32, %cst_15 {dimension_numbers = #tpu.dot_dimension_numbers<[1], [0], [0], [1], [0, 0, 1, 1], [], []>} : vector<8x32xbf16>, vector<32x96xbf16>, vector<8x96xf32> -> vector<8x96xf32>
    %c0_16 = arith.constant 0 : index
    %c0_17 = arith.constant 0 : index
    %c0_18 = arith.constant 0 : index
    %34 = vector.load %arg6[%c0_16, %c0_17, %c0_18] : memref<1x1x96xf32, #tpu.memory_space<vmem>>, vector<1x1x96xf32>
    %35 = vector.shape_cast %34 : vector<1x1x96xf32> to vector<1x96xf32>
    %36 = vector.broadcast %35 : vector<1x96xf32> to vector<8x96xf32>
    %37 = arith.addf %33, %36 : vector<8x96xf32>
    %38 = arith.truncf %37 : vector<8x96xf32> to vector<8x96xbf16>
    %cst_19 = arith.constant 0.000000e+00 : f32
    %39 = vector.broadcast %cst_19 : f32 to vector<8x8xf32>
    %40 = vector.extract_strided_slice %38 {offsets = [0, 0], sizes = [8, 8], strides = [1, 1]} : vector<8x96xbf16> to vector<8x8xbf16>
    %41 = vector.extract_strided_slice %38 {offsets = [0, 32], sizes = [8, 8], strides = [1, 1]} : vector<8x96xbf16> to vector<8x8xbf16>
    %42 = vector.extract_strided_slice %38 {offsets = [0, 64], sizes = [8, 8], strides = [1, 1]} : vector<8x96xbf16> to vector<8x8xbf16>
    %cst_20 = arith.constant dense<0.000000e+00> : vector<8x8xf32>
    %43 = tpu.matmul %40, %41, %cst_20 {dimension_numbers = #tpu.dot_dimension_numbers<[1], [1], [0], [0], [0, 0, 1, 0], [], []>} : vector<8x8xbf16>, vector<8x8xbf16>, vector<8x8xf32> -> vector<8x8xf32>
    %cst_21 = arith.constant 0.353553385 : f32
    %44 = vector.broadcast %cst_21 : f32 to vector<8x8xf32>
    %45 = arith.mulf %43, %44 : vector<8x8xf32>
    %cst_22 = arith.constant dense<0xFF800000> : vector<8xf32>
    %46 = vector.multi_reduction <maximumf>, %45, %cst_22 [1] : vector<8x8xf32> to vector<8xf32>
    %47 = vector.shape_cast %46 : vector<8xf32> to vector<8x1xf32>
    %48 = vector.broadcast %47 : vector<8x1xf32> to vector<8x8xf32>
    %49 = arith.subf %45, %48 : vector<8x8xf32>
    %50 = math.exp %49 : vector<8x8xf32>
    %cst_23 = arith.constant dense<0.000000e+00> : vector<8xf32>
    %51 = vector.multi_reduction <add>, %50, %cst_23 [1] : vector<8x8xf32> to vector<8xf32>
    %52 = vector.shape_cast %51 : vector<8xf32> to vector<8x1xf32>
    %cst_24 = arith.constant 1.000000e+00 : f32
    %53 = vector.broadcast %cst_24 : f32 to vector<8x1xf32>
    %54 = arith.divf %53, %52 : vector<8x1xf32>
    %55 = vector.broadcast %54 : vector<8x1xf32> to vector<8x8xf32>
    %56 = arith.mulf %50, %55 : vector<8x8xf32>
    %57 = arith.addf %39, %56 : vector<8x8xf32>
    %58 = arith.truncf %56 : vector<8x8xf32> to vector<8x8xbf16>
    %cst_25 = arith.constant dense<0.000000e+00> : vector<8x8xf32>
    %59 = tpu.matmul %58, %42, %cst_25 {dimension_numbers = #tpu.dot_dimension_numbers<[1], [0], [0], [1], [0, 0, 1, 1], [], []>} : vector<8x8xbf16>, vector<8x8xbf16>, vector<8x8xf32> -> vector<8x8xf32>
    %60 = arith.truncf %59 : vector<8x8xf32> to vector<8x8xbf16>
    %c0_26 = arith.constant 0 : index
    %c0_27 = arith.constant 0 : index
    %61 = vector.load %arg18[%c0_26, %c0_27] : memref<8x32xbf16, #tpu.memory_space<vmem>>, vector<8x8xbf16>
    tpu.vector_store %arg18[%c0_26, %c0_27], %60 {strides = array<i32>} : memref<8x32xbf16, #tpu.memory_space<vmem>>, vector<8x8xbf16>,
    %62 = vector.extract_strided_slice %38 {offsets = [0, 8], sizes = [8, 8], strides = [1, 1]} : vector<8x96xbf16> to vector<8x8xbf16>
    %63 = vector.extract_strided_slice %38 {offsets = [0, 40], sizes = [8, 8], strides = [1, 1]} : vector<8x96xbf16> to vector<8x8xbf16>
    %64 = vector.extract_strided_slice %38 {offsets = [0, 72], sizes = [8, 8], strides = [1, 1]} : vector<8x96xbf16> to vector<8x8xbf16>
    %cst_28 = arith.constant dense<0.000000e+00> : vector<8x8xf32>
    %65 = tpu.matmul %62, %63, %cst_28 {dimension_numbers = #tpu.dot_dimension_numbers<[1], [1], [0], [0], [0, 0, 1, 0], [], []>} : vector<8x8xbf16>, vector<8x8xbf16>, vector<8x8xf32> -> vector<8x8xf32>
    %cst_29 = arith.constant 0.353553385 : f32
    %66 = vector.broadcast %cst_29 : f32 to vector<8x8xf32>
    %67 = arith.mulf %65, %66 : vector<8x8xf32>
    %cst_30 = arith.constant dense<0xFF800000> : vector<8xf32>
    %68 = vector.multi_reduction <maximumf>, %67, %cst_30 [1] : vector<8x8xf32> to vector<8xf32>
    %69 = vector.shape_cast %68 : vector<8xf32> to vector<8x1xf32>
    %70 = vector.broadcast %69 : vector<8x1xf32> to vector<8x8xf32>
    %71 = arith.subf %67, %70 : vector<8x8xf32>
    %72 = math.exp %71 : vector<8x8xf32>
    %cst_31 = arith.constant dense<0.000000e+00> : vector<8xf32>
    %73 = vector.multi_reduction <add>, %72, %cst_31 [1] : vector<8x8xf32> to vector<8xf32>
    %74 = vector.shape_cast %73 : vector<8xf32> to vector<8x1xf32>
    %cst_32 = arith.constant 1.000000e+00 : f32
    %75 = vector.broadcast %cst_32 : f32 to vector<8x1xf32>
    %76 = arith.divf %75, %74 : vector<8x1xf32>
    %77 = vector.broadcast %76 : vector<8x1xf32> to vector<8x8xf32>
    %78 = arith.mulf %72, %77 : vector<8x8xf32>
    %79 = arith.addf %57, %78 : vector<8x8xf32>
    %80 = arith.truncf %78 : vector<8x8xf32> to vector<8x8xbf16>
    %cst_33 = arith.constant dense<0.000000e+00> : vector<8x8xf32>
    %81 = tpu.matmul %80, %64, %cst_33 {dimension_numbers = #tpu.dot_dimension_numbers<[1], [0], [0], [1], [0, 0, 1, 1], [], []>} : vector<8x8xbf16>, vector<8x8xbf16>, vector<8x8xf32> -> vector<8x8xf32>
    %82 = arith.truncf %81 : vector<8x8xf32> to vector<8x8xbf16>
    %c0_34 = arith.constant 0 : index
    %c8 = arith.constant 8 : index
    %83 = vector.load %arg18[%c0_34, %c8] : memref<8x32xbf16, #tpu.memory_space<vmem>>, vector<8x8xbf16>
    tpu.vector_store %arg18[%c0_34, %c8], %82 {strides = array<i32>} : memref<8x32xbf16, #tpu.memory_space<vmem>>, vector<8x8xbf16>,
    %84 = vector.extract_strided_slice %38 {offsets = [0, 16], sizes = [8, 8], strides = [1, 1]} : vector<8x96xbf16> to vector<8x8xbf16>
    %85 = vector.extract_strided_slice %38 {offsets = [0, 48], sizes = [8, 8], strides = [1, 1]} : vector<8x96xbf16> to vector<8x8xbf16>
    %86 = vector.extract_strided_slice %38 {offsets = [0, 80], sizes = [8, 8], strides = [1, 1]} : vector<8x96xbf16> to vector<8x8xbf16>
    %cst_35 = arith.constant dense<0.000000e+00> : vector<8x8xf32>
    %87 = tpu.matmul %84, %85, %cst_35 {dimension_numbers = #tpu.dot_dimension_numbers<[1], [1], [0], [0], [0, 0, 1, 0], [], []>} : vector<8x8xbf16>, vector<8x8xbf16>, vector<8x8xf32> -> vector<8x8xf32>
    %cst_36 = arith.constant 0.353553385 : f32
    %88 = vector.broadcast %cst_36 : f32 to vector<8x8xf32>
    %89 = arith.mulf %87, %88 : vector<8x8xf32>
    %cst_37 = arith.constant dense<0xFF800000> : vector<8xf32>
    %90 = vector.multi_reduction <maximumf>, %89, %cst_37 [1] : vector<8x8xf32> to vector<8xf32>
    %91 = vector.shape_cast %90 : vector<8xf32> to vector<8x1xf32>
    %92 = vector.broadcast %91 : vector<8x1xf32> to vector<8x8xf32>
    %93 = arith.subf %89, %92 : vector<8x8xf32>
    %94 = math.exp %93 : vector<8x8xf32>
    %cst_38 = arith.constant dense<0.000000e+00> : vector<8xf32>
    %95 = vector.multi_reduction <add>, %94, %cst_38 [1] : vector<8x8xf32> to vector<8xf32>
    %96 = vector.shape_cast %95 : vector<8xf32> to vector<8x1xf32>
    %cst_39 = arith.constant 1.000000e+00 : f32
    %97 = vector.broadcast %cst_39 : f32 to vector<8x1xf32>
    %98 = arith.divf %97, %96 : vector<8x1xf32>
    %99 = vector.broadcast %98 : vector<8x1xf32> to vector<8x8xf32>
    %100 = arith.mulf %94, %99 : vector<8x8xf32>
    %101 = arith.addf %79, %100 : vector<8x8xf32>
    %102 = arith.truncf %100 : vector<8x8xf32> to vector<8x8xbf16>
    %cst_40 = arith.constant dense<0.000000e+00> : vector<8x8xf32>
    %103 = tpu.matmul %102, %86, %cst_40 {dimension_numbers = #tpu.dot_dimension_numbers<[1], [0], [0], [1], [0, 0, 1, 1], [], []>} : vector<8x8xbf16>, vector<8x8xbf16>, vector<8x8xf32> -> vector<8x8xf32>
    %104 = arith.truncf %103 : vector<8x8xf32> to vector<8x8xbf16>
    %c0_41 = arith.constant 0 : index
    %c16 = arith.constant 16 : index
    %105 = vector.load %arg18[%c0_41, %c16] : memref<8x32xbf16, #tpu.memory_space<vmem>>, vector<8x8xbf16>
    tpu.vector_store %arg18[%c0_41, %c16], %104 {strides = array<i32>} : memref<8x32xbf16, #tpu.memory_space<vmem>>, vector<8x8xbf16>,
    %106 = vector.extract_strided_slice %38 {offsets = [0, 24], sizes = [8, 8], strides = [1, 1]} : vector<8x96xbf16> to vector<8x8xbf16>
    %107 = vector.extract_strided_slice %38 {offsets = [0, 56], sizes = [8, 8], strides = [1, 1]} : vector<8x96xbf16> to vector<8x8xbf16>
    %108 = vector.extract_strided_slice %38 {offsets = [0, 88], sizes = [8, 8], strides = [1, 1]} : vector<8x96xbf16> to vector<8x8xbf16>
    %cst_42 = arith.constant dense<0.000000e+00> : vector<8x8xf32>
    %109 = tpu.matmul %106, %107, %cst_42 {dimension_numbers = #tpu.dot_dimension_numbers<[1], [1], [0], [0], [0, 0, 1, 0], [], []>} : vector<8x8xbf16>, vector<8x8xbf16>, vector<8x8xf32> -> vector<8x8xf32>
    %cst_43 = arith.constant 0.353553385 : f32
    %110 = vector.broadcast %cst_43 : f32 to vector<8x8xf32>
    %111 = arith.mulf %109, %110 : vector<8x8xf32>
    %cst_44 = arith.constant dense<0xFF800000> : vector<8xf32>
    %112 = vector.multi_reduction <maximumf>, %111, %cst_44 [1] : vector<8x8xf32> to vector<8xf32>
    %113 = vector.shape_cast %112 : vector<8xf32> to vector<8x1xf32>
    %114 = vector.broadcast %113 : vector<8x1xf32> to vector<8x8xf32>
    %115 = arith.subf %111, %114 : vector<8x8xf32>
    %116 = math.exp %115 : vector<8x8xf32>
    %cst_45 = arith.constant dense<0.000000e+00> : vector<8xf32>
    %117 = vector.multi_reduction <add>, %116, %cst_45 [1] : vector<8x8xf32> to vector<8xf32>
    %118 = vector.shape_cast %117 : vector<8xf32> to vector<8x1xf32>
    %cst_46 = arith.constant 1.000000e+00 : f32
    %119 = vector.broadcast %cst_46 : f32 to vector<8x1xf32>
    %120 = arith.divf %119, %118 : vector<8x1xf32>
    %121 = vector.broadcast %120 : vector<8x1xf32> to vector<8x8xf32>
    %122 = arith.mulf %116, %121 : vector<8x8xf32>
    %123 = arith.addf %101, %122 : vector<8x8xf32>
    %124 = arith.truncf %122 : vector<8x8xf32> to vector<8x8xbf16>
    %cst_47 = arith.constant dense<0.000000e+00> : vector<8x8xf32>
    %125 = tpu.matmul %124, %108, %cst_47 {dimension_numbers = #tpu.dot_dimension_numbers<[1], [0], [0], [1], [0, 0, 1, 1], [], []>} : vector<8x8xbf16>, vector<8x8xbf16>, vector<8x8xf32> -> vector<8x8xf32>
    %126 = arith.truncf %125 : vector<8x8xf32> to vector<8x8xbf16>
    %c0_48 = arith.constant 0 : index
    %c24 = arith.constant 24 : index
    %127 = vector.load %arg18[%c0_48, %c24] : memref<8x32xbf16, #tpu.memory_space<vmem>>, vector<8x8xbf16>
    tpu.vector_store %arg18[%c0_48, %c24], %126 {strides = array<i32>} : memref<8x32xbf16, #tpu.memory_space<vmem>>, vector<8x8xbf16>,
    %c0_49 = arith.constant 0 : index
    %c0_50 = arith.constant 0 : index
    %128 = vector.load %arg18[%c0_49, %c0_50] : memref<8x32xbf16, #tpu.memory_space<vmem>>, vector<8x32xbf16>
    %c0_51 = arith.constant 0 : index
    %c0_52 = arith.constant 0 : index
    %c0_53 = arith.constant 0 : index
    %129 = vector.load %arg7[%c0_51, %c0_52, %c0_53] : memref<1x32x32xbf16, #tpu.memory_space<vmem>>, vector<1x32x32xbf16>
    %130 = vector.shape_cast %129 : vector<1x32x32xbf16> to vector<32x32xbf16>
    %cst_54 = arith.constant dense<0.000000e+00> : vector<8x32xf32>
    %131 = tpu.matmul %128, %130, %cst_54 {dimension_numbers = #tpu.dot_dimension_numbers<[1], [0], [0], [1], [0, 0, 1, 1], [], []>} : vector<8x32xbf16>, vector<32x32xbf16>, vector<8x32xf32> -> vector<8x32xf32>
    %c0_55 = arith.constant 0 : index
    %c0_56 = arith.constant 0 : index
    %c0_57 = arith.constant 0 : index
    %132 = vector.load %arg8[%c0_55, %c0_56, %c0_57] : memref<1x1x32xf32, #tpu.memory_space<vmem>>, vector<1x1x32xf32>
    %133 = vector.shape_cast %132 : vector<1x1x32xf32> to vector<1x32xf32>
    %134 = vector.broadcast %133 : vector<1x32xf32> to vector<8x32xf32>
    %135 = arith.addf %131, %134 : vector<8x32xf32>
    %136 = arith.addf %3, %135 : vector<8x32xf32>
    %c0_58 = arith.constant 0 : index
    %c0_59 = arith.constant 0 : index
    %c0_60 = arith.constant 0 : index
    %137 = vector.load %arg9[%c0_58, %c0_59, %c0_60] : memref<1x1x32xf32, #tpu.memory_space<vmem>>, vector<1x1x32xf32>
    %138 = vector.shape_cast %137 : vector<1x1x32xf32> to vector<1x32xf32>
    %c0_61 = arith.constant 0 : index
    %c0_62 = arith.constant 0 : index
    %c0_63 = arith.constant 0 : index
    %139 = vector.load %arg10[%c0_61, %c0_62, %c0_63] : memref<1x1x32xf32, #tpu.memory_space<vmem>>, vector<1x1x32xf32>
    %140 = vector.shape_cast %139 : vector<1x1x32xf32> to vector<1x32xf32>
    %cst_64 = arith.constant dense<0.000000e+00> : vector<8xf32>
    %141 = vector.multi_reduction <add>, %136, %cst_64 [1] : vector<8x32xf32> to vector<8xf32>
    %142 = vector.shape_cast %141 : vector<8xf32> to vector<8x1xf32>
    %cst_65 = arith.constant 3.200000e+01 : f32
    %143 = vector.broadcast %cst_65 : f32 to vector<8x1xf32>
    %144 = arith.divf %142, %143 : vector<8x1xf32>
    %145 = vector.broadcast %144 : vector<8x1xf32> to vector<8x32xf32>
    %146 = arith.subf %136, %145 : vector<8x32xf32>
    %147 = arith.mulf %146, %146 : vector<8x32xf32>
    %cst_66 = arith.constant dense<0.000000e+00> : vector<8xf32>
    %148 = vector.multi_reduction <add>, %147, %cst_66 [1] : vector<8x32xf32> to vector<8xf32>
    %149 = vector.shape_cast %148 : vector<8xf32> to vector<8x1xf32>
    %cst_67 = arith.constant 3.200000e+01 : f32
    %150 = vector.broadcast %cst_67 : f32 to vector<8x1xf32>
    %151 = arith.divf %149, %150 : vector<8x1xf32>
    %152 = vector.broadcast %144 : vector<8x1xf32> to vector<8x32xf32>
    %153 = arith.subf %136, %152 : vector<8x32xf32>
    %cst_68 = arith.constant 9.99999974E-6 : f32
    %154 = vector.broadcast %cst_68 : f32 to vector<8x1xf32>
    %155 = arith.addf %151, %154 : vector<8x1xf32>
    %156 = math.rsqrt %155 : vector<8x1xf32>
    %157 = vector.broadcast %156 : vector<8x1xf32> to vector<8x32xf32>
    %158 = arith.mulf %153, %157 : vector<8x32xf32>
    %159 = vector.broadcast %138 : vector<1x32xf32> to vector<8x32xf32>
    %160 = arith.mulf %158, %159 : vector<8x32xf32>
    %161 = vector.broadcast %140 : vector<1x32xf32> to vector<8x32xf32>
    %162 = arith.addf %160, %161 : vector<8x32xf32>
    %163 = arith.truncf %162 : vector<8x32xf32> to vector<8x32xbf16>
    %c0_69 = arith.constant 0 : index
    %c0_70 = arith.constant 0 : index
    %c0_71 = arith.constant 0 : index
    %164 = vector.load %arg11[%c0_69, %c0_70, %c0_71] : memref<1x32x64xbf16, #tpu.memory_space<vmem>>, vector<1x32x64xbf16>
    %165 = vector.shape_cast %164 : vector<1x32x64xbf16> to vector<32x64xbf16>
    %cst_72 = arith.constant dense<0.000000e+00> : vector<8x64xf32>
    %166 = tpu.matmul %163, %165, %cst_72 {dimension_numbers = #tpu.dot_dimension_numbers<[1], [0], [0], [1], [0, 0, 1, 1], [], []>} : vector<8x32xbf16>, vector<32x64xbf16>, vector<8x64xf32> -> vector<8x64xf32>
    %c0_73 = arith.constant 0 : index
    %c0_74 = arith.constant 0 : index
    %c0_75 = arith.constant 0 : index
    %167 = vector.load %arg12[%c0_73, %c0_74, %c0_75] : memref<1x1x64xf32, #tpu.memory_space<vmem>>, vector<1x1x64xf32>
    %168 = vector.shape_cast %167 : vector<1x1x64xf32> to vector<1x64xf32>
    %169 = vector.broadcast %168 : vector<1x64xf32> to vector<8x64xf32>
    %170 = arith.addf %166, %169 : vector<8x64xf32>
    %cst_76 = arith.constant 0.000000e+00 : f32
    %171 = vector.broadcast %cst_76 : f32 to vector<8x64xf32>
    %172 = arith.maximumf %170, %171 : vector<8x64xf32>
    %173 = arith.truncf %172 : vector<8x64xf32> to vector<8x64xbf16>
    %c0_77 = arith.constant 0 : index
    %c0_78 = arith.constant 0 : index
    %c0_79 = arith.constant 0 : index
    %174 = vector.load %arg13[%c0_77, %c0_78, %c0_79] : memref<1x64x32xbf16, #tpu.memory_space<vmem>>, vector<1x64x32xbf16>
    %175 = vector.shape_cast %174 : vector<1x64x32xbf16> to vector<64x32xbf16>
    %cst_80 = arith.constant dense<0.000000e+00> : vector<8x32xf32>
    %176 = tpu.matmul %173, %175, %cst_80 {dimension_numbers = #tpu.dot_dimension_numbers<[1], [0], [0], [1], [0, 0, 1, 1], [], []>} : vector<8x64xbf16>, vector<64x32xbf16>, vector<8x32xf32> -> vector<8x32xf32>
    %c0_81 = arith.constant 0 : index
    %c0_82 = arith.constant 0 : index
    %c0_83 = arith.constant 0 : index
    %177 = vector.load %arg14[%c0_81, %c0_82, %c0_83] : memref<1x1x32xf32, #tpu.memory_space<vmem>>, vector<1x1x32xf32>
    %178 = vector.shape_cast %177 : vector<1x1x32xf32> to vector<1x32xf32>
    %179 = vector.broadcast %178 : vector<1x32xf32> to vector<8x32xf32>
    %180 = arith.addf %176, %179 : vector<8x32xf32>
    %181 = arith.addf %136, %180 : vector<8x32xf32>
    %c0_84 = arith.constant 0 : index
    %c0_85 = arith.constant 0 : index
    %182 = vector.load %arg17[%c0_84, %c0_85] : memref<8x32xf32, #tpu.memory_space<vmem>>, vector<8x32xf32>
    tpu.vector_store %arg17[%c0_84, %c0_85], %181 {strides = array<i32>} : memref<8x32xf32, #tpu.memory_space<vmem>>, vector<8x32xf32>,
    %c1_i32 = arith.constant 1 : i32
    %183 = arith.cmpi eq, %arg1, %c1_i32 : i32
    %184 = arith.extui %183 : i1 to i32
    %c0_i32_86 = arith.constant 0 : i32
    %185 = arith.cmpi ne, %184, %c0_i32_86 : i32
    scf.if %185 {
      %c0_87 = arith.constant 0 : index
      %c0_88 = arith.constant 0 : index
      %c0_89 = arith.constant 0 : index
      %186 = vector.load %arg15[%c0_87, %c0_88, %c0_89] : memref<1x8x32xf32, #tpu.memory_space<vmem>>, vector<1x8x32xf32>
      %187 = vector.shape_cast %186 : vector<1x8x32xf32> to vector<8x32xf32>
      %188 = vector.shape_cast %181 : vector<8x32xf32> to vector<1x8x32xf32>
      tpu.vector_store %arg15[%c0_87, %c0_88, %c0_89], %188 {strides = array<i32>} : memref<1x8x32xf32, #tpu.memory_space<vmem>>, vector<1x8x32xf32>,
      %cst_90 = arith.constant 2.500000e-01 : f32
      %189 = vector.broadcast %cst_90 : f32 to vector<8x8xf32>
      %190 = arith.mulf %123, %189 : vector<8x8xf32>
      %c0_91 = arith.constant 0 : index
      %c0_92 = arith.constant 0 : index
      %c0_93 = arith.constant 0 : index
      %191 = vector.load %arg16[%c0_91, %c0_92, %c0_93] : memref<1x8x8xf32, #tpu.memory_space<vmem>>, vector<1x8x8xf32>
      %192 = vector.shape_cast %191 : vector<1x8x8xf32> to vector<8x8xf32>
      %193 = vector.shape_cast %190 : vector<8x8xf32> to vector<1x8x8xf32>
      tpu.vector_store %arg16[%c0_91, %c0_92, %c0_93], %193 {strides = array<i32>} : memref<1x8x8xf32, #tpu.memory_space<vmem>>, vector<1x8x8xf32>,
    } else {
    }
    return
  }
  func.func @transform_0(%arg0: i32, %arg1: i32) -> (i32, i32, i32) {
    %c0_i32 = arith.constant 0 : i32
    %c0_i32_0 = arith.constant 0 : i32
    %c0_i32_1 = arith.constant 0 : i32
    return %arg0, %c0_i32, %c0_i32_0 : i32, i32, i32
  }
  func.func @transform_1(%arg0: i32, %arg1: i32) -> (i32, i32, i32) {
    %c0_i32 = arith.constant 0 : i32
    %c0_i32_0 = arith.constant 0 : i32
    %c0_i32_1 = arith.constant 0 : i32
    return %arg1, %c0_i32, %c0_i32_0 : i32, i32, i32
  }
  func.func @transform_2(%arg0: i32, %arg1: i32) -> (i32, i32, i32) {
    %c0_i32 = arith.constant 0 : i32
    %c0_i32_0 = arith.constant 0 : i32
    %c0_i32_1 = arith.constant 0 : i32
    return %arg1, %c0_i32, %c0_i32_0 : i32, i32, i32
  }
  func.func @transform_3(%arg0: i32, %arg1: i32) -> (i32, i32, i32) {
    %c0_i32 = arith.constant 0 : i32
    %c0_i32_0 = arith.constant 0 : i32
    %c0_i32_1 = arith.constant 0 : i32
    return %arg1, %c0_i32, %c0_i32_0 : i32, i32, i32
  }
  func.func @transform_4(%arg0: i32, %arg1: i32) -> (i32, i32, i32) {
    %c0_i32 = arith.constant 0 : i32
    %c0_i32_0 = arith.constant 0 : i32
    %c0_i32_1 = arith.constant 0 : i32
    return %arg1, %c0_i32, %c0_i32_0 : i32, i32, i32
  }
  func.func @transform_5(%arg0: i32, %arg1: i32) -> (i32, i32, i32) {
    %c0_i32 = arith.constant 0 : i32
    %c0_i32_0 = arith.constant 0 : i32
    %c0_i32_1 = arith.constant 0 : i32
    return %arg1, %c0_i32, %c0_i32_0 : i32, i32, i32
  }
  func.func @transform_6(%arg0: i32, %arg1: i32) -> (i32, i32, i32) {
    %c0_i32 = arith.constant 0 : i32
    %c0_i32_0 = arith.constant 0 : i32
    %c0_i32_1 = arith.constant 0 : i32
    return %arg1, %c0_i32, %c0_i32_0 : i32, i32, i32
  }
  func.func @transform_7(%arg0: i32, %arg1: i32) -> (i32, i32, i32) {
    %c0_i32 = arith.constant 0 : i32
    %c0_i32_0 = arith.constant 0 : i32
    %c0_i32_1 = arith.constant 0 : i32
    return %arg1, %c0_i32, %c0_i32_0 : i32, i32, i32
  }
  func.func @transform_8(%arg0: i32, %arg1: i32) -> (i32, i32, i32) {
    %c0_i32 = arith.constant 0 : i32
    %c0_i32_0 = arith.constant 0 : i32
    %c0_i32_1 = arith.constant 0 : i32
    return %arg1, %c0_i32, %c0_i32_0 : i32, i32, i32
  }
  func.func @transform_9(%arg0: i32, %arg1: i32) -> (i32, i32, i32) {
    %c0_i32 = arith.constant 0 : i32
    %c0_i32_0 = arith.constant 0 : i32
    %c0_i32_1 = arith.constant 0 : i32
    return %arg1, %c0_i32, %c0_i32_0 : i32, i32, i32
  }
  func.func @transform_10(%arg0: i32, %arg1: i32) -> (i32, i32, i32) {
    %c0_i32 = arith.constant 0 : i32
    %c0_i32_0 = arith.constant 0 : i32
    %c0_i32_1 = arith.constant 0 : i32
    return %arg1, %c0_i32, %c0_i32_0 : i32, i32, i32
  }
  func.func @transform_11(%arg0: i32, %arg1: i32) -> (i32, i32, i32) {
    %c0_i32 = arith.constant 0 : i32
    %c0_i32_0 = arith.constant 0 : i32
    %c0_i32_1 = arith.constant 0 : i32
    return %arg1, %c0_i32, %c0_i32_0 : i32, i32, i32
  }
  func.func @transform_12(%arg0: i32, %arg1: i32) -> (i32, i32, i32) {
    %c0_i32 = arith.constant 0 : i32
    %c0_i32_0 = arith.constant 0 : i32
    %c0_i32_1 = arith.constant 0 : i32
    return %arg1, %c0_i32, %c0_i32_0 : i32, i32, i32
  }
  func.func @transform_13(%arg0: i32, %arg1: i32) -> (i32, i32, i32) {
    %c0_i32 = arith.constant 0 : i32
    %c0_i32_0 = arith.constant 0 : i32
    %c0_i32_1 = arith.constant 0 : i32
    return %arg0, %c0_i32, %c0_i32_0 : i32, i32, i32
  }
  func.func @transform_14(%arg0: i32, %arg1: i32) -> (i32, i32, i32) {
    %c0_i32 = arith.constant 0 : i32
    %c0_i32_0 = arith.constant 0 : i32
    %c0_i32_1 = arith.constant 0 : i32
    return %arg0, %c0_i32, %c0_i32_0 : i32, i32, i32
  }
}

</mosaic_0001>

<llo_original>
// kernel: tpu_custom_call.1
$region0: #{tpu_custom_call.1}
  #allocation0 [shape = 'u32[]', space=smem, size = 0x4, offset = 0x4, fixed_abs, tag = 'smem constant byte address 0x4 - core index']
  #allocation1 [shape = 'u32[144,128]{1,0:T(1,128)}', space=vmem, size = 0x12000, scoped, tag = 'internal scratch']
  #allocation2 [shape = 'f32[8,32]{1,0:T(8,128)}', space=vmem, size = 0x1000, scoped, tag = 'scratch operand']
  #allocation3 [shape = 'bf16[8,32]{1,0:T(8,128)(2,1)}', space=vmem, size = 0x800, scoped, tag = 'scratch operand']
  %s0 = inlined_call_operand.hbm [shape: f32[2,8,32], index: 0, kind: input, shape index: {}]
  %s1 = inlined_call_operand.vmem [shape: f32[2,1,32], index: 1, kind: input, shape index: {}]
  %s2 = inlined_call_operand.vmem [shape: f32[2,1,32], index: 2, kind: input, shape index: {}]
  %s3 = inlined_call_operand.vmem [shape: bf16[2,32,96], index: 3, kind: input, shape index: {}]
  %s4 = inlined_call_operand.vmem [shape: f32[2,1,96], index: 4, kind: input, shape index: {}]
  %s5 = inlined_call_operand.vmem [shape: bf16[2,32,32], index: 5, kind: input, shape index: {}]
  %s6 = inlined_call_operand.vmem [shape: f32[2,1,32], index: 6, kind: input, shape index: {}]
  %s7 = inlined_call_operand.hbm [shape: f32[2,1,32], index: 7, kind: input, shape index: {}]
  %s8 = inlined_call_operand.hbm [shape: f32[2,1,32], index: 8, kind: input, shape index: {}]
  %s9 = inlined_call_operand.vmem [shape: bf16[2,32,64], index: 9, kind: input, shape index: {}]
  %s10 = inlined_call_operand.hbm [shape: f32[2,1,64], index: 10, kind: input, shape index: {}]
  %s11 = inlined_call_operand.vmem [shape: bf16[2,64,32], index: 11, kind: input, shape index: {}]
  %s12 = inlined_call_operand.vmem [shape: f32[2,1,32], index: 12, kind: input, shape index: {}]
  %s13 = inlined_call_operand.hbm [shape: f32[2,8,32], index: 13, kind: output, shape index: {0}]
  %s14 = inlined_call_operand.hbm [shape: f32[2,8,8], index: 14, kind: output, shape index: {1}]
  %15 = xla_tuple %s13, %s14
  %s16 = sld [smem:[#allocation0]]
  $region117: #{tpu_custom_call.1} parent=0
    _
  %s18 = ssub.s32 1, %s16
  %s19 = scalar_select 0, %s18, %s16
  $region1: #{tpu_custom_call.1} parent=0
    #allocation4 [shape = 'u8[8192]{0}', space=vmem, size = 0x2000, scoped, tag = 'input window, operand 0']
    #allocation5 [shape = 's32[2]{0}', space=sflag, size = 0x8, scoped, tag = 'scoped memory for tpu_custom_call.1']
    #allocation6 [shape = 's32[2]{0}', space=sflag, size = 0x8, scoped, tag = 'scoped memory for tpu_custom_call.1']
    #allocation7 [shape = 'u8[1024]{0}', space=vmem, size = 0x400, scoped, tag = 'input window, operand 7']
    #allocation8 [shape = 's32[2]{0}', space=sflag, size = 0x8, scoped, tag = 'scoped memory for tpu_custom_call.1']
    #allocation9 [shape = 'u8[1024]{0}', space=vmem, size = 0x400, scoped, tag = 'input window, operand 8']
    #allocation10 [shape = 'u8[1024]{0}', space=vmem, size = 0x400, scoped, tag = 'input window, operand 10']
    #allocation11 [shape = 's32[2]{0}', space=sflag, size = 0x8, scoped, tag = 'scoped memory for tpu_custom_call.1']
    #allocation12 [shape = 'u8[8192]{0}', space=vmem, size = 0x2000, scoped, tag = 'output window, operand 0']
    #allocation13 [shape = 'u8[8192]{0}', space=vmem, size = 0x2000, scoped, tag = 'output window, operand 1']
    #allocation14 [shape = 's32[2]{0}', space=sflag, size = 0x8, scoped, tag = 'scoped memory for tpu_custom_call.1']
    %20 = vsyncpa [#allocation5], 0
    %s21 = scalar_lea.sflag [#allocation5], 1
    %22 = vsyncpa %s21, 0
    %23 = vsyncpa [#allocation8], 0
    %s24 = scalar_lea.sflag [#allocation8], 1
    %25 = vsyncpa %s24, 0
    %26 = vsyncpa [#allocation11], 0
    %s27 = scalar_lea.sflag [#allocation11], 1
    %28 = vsyncpa %s27, 0
    %29 = vsyncpa [#allocation6], 0
    %s30 = scalar_lea.sflag [#allocation6], 1
    %31 = vsyncpa %s30, 0
    %32 = vsyncpa [#allocation14], 0
    %s33 = scalar_lea.sflag [#allocation14], 1
    %34 = vsyncpa %s33, 0
    loop: start=0, step=1, limit=6
    $region2: #{tpu_custom_call.1} parent=1 // loop_pre_header
      _
    $region3: #{tpu_custom_call.1} parent=1 // loop_header
      %s36 = sphi 0, %s40
      %p37 = scmp.ge.s32.totalorder %s36, 6
      %s43 = sphi 0, %s55
      %s44 = sphi 0, %s51
      %s45 = sphi 0, %s43
      %s46 = sphi 0, %s44
      %s47 = sphi 0, %s45
      %s48 = sphi 0, %s46
      %s58 = sphi 0, %s60
      %s61 = sphi 0, %s58
      %s62 = sphi 0, %s61
      %s78 = sphi 0, %s62
      %s84 = sphi 0, %s86
      %s87 = sphi 0, %s84
      %s88 = sphi 0, %s87
      %s104 = sphi 0, %s88
      %s110 = sphi 0, %s112
      %s113 = sphi 0, %s110
      %s114 = sphi 0, %s113
      %s130 = sphi 0, %s114
      %s136 = sphi 0, %s138
      %s139 = sphi 0, %s136
      %s140 = sphi 0, %s139
      %s156 = sphi 0, %s140
      %s162 = sphi 0, %s164
      %s165 = sphi 0, %s162
      %s166 = sphi 0, %s165
      %s182 = sphi 0, %s166
      %s188 = sphi 0, %s190
      %s191 = sphi 0, %s188
      %s192 = sphi 0, %s191
      %s208 = sphi 0, %s192
      %s214 = sphi 0, %s216
      %s217 = sphi 0, %s214
      %s218 = sphi 0, %s217
      %s234 = sphi 0, %s218
      %s240 = sphi 0, %s242
      %s243 = sphi 0, %s240
      %s244 = sphi 0, %s243
      %s260 = sphi 0, %s244
      %s266 = sphi 0, %s268
      %s269 = sphi 0, %s266
      %s270 = sphi 0, %s269
      %s286 = sphi 0, %s270
      %s292 = sphi 0, %s294
      %s295 = sphi 0, %s292
      %s296 = sphi 0, %s295
      %s312 = sphi 0, %s296
      %s318 = sphi 0, %s320
      %s321 = sphi 0, %s318
      %s322 = sphi 0, %s321
      %s338 = sphi 0, %s322
      %s344 = sphi 0, %s346
      %s347 = sphi 0, %s344
      %s348 = sphi 0, %s347
      %s364 = sphi 0, %s348
      %s370 = sphi 0, %s372
      %s373 = sphi 0, %s370
      %s374 = sphi 0, %s373
      %s390 = sphi 0, %s374
      %s396 = sphi 0, %s398
      %s399 = sphi 0, %s396
      %s400 = sphi 0, %s399
      %s416 = sphi 0, %s400
      %s422 = sphi 0, %s424
      %s425 = sphi 0, %s422
      %s426 = sphi 0, %s425
      %s442 = sphi 0, %s426
    $region4: #{tpu_custom_call.1} parent=1 // loop_header_branch
      %39 = sbr.rel (%p37) target = $region8
    $region5: #{tpu_custom_call.1} parent=1 // loop_body
      %s41 = ssub.s32 %s36, 1
      %s42 = ssub.s32 %s36, 2
      %s49 = sadd.s32 1, %s44
      %p50 = scmp.ge.s32.totalorder %s49, 2
      %s51 = scalar_select %p50, 0, %s49
      %s52 = sadd.s32 1, %s43
      %s53 = scalar_select %p50, %s52, %s43
      %p54 = scmp.ge.s32.totalorder %s53, 2
      %s55 = scalar_select %p54, 0, %s53
      %s56 = ssub.s32 %s43, %s55
      %p57 = scmp.eq.s32.totalorder %s56, 0
      %s59 = sadd.s32 %s58, 1
      %s60 = scalar_select %p57, %s58, %s59
      %p63 = pneg %p57
      %p64 = scmp.eq.s32.totalorder %s36, 3
      %p65 = por %p63, %p64
      %p66 = scmp.ne.s32.totalorder %s58, %s61
      %p67 = scmp.eq.s32.totalorder %s36, 0
      %p68 = por %p66, %p67
      %p69 = scmp.ne.s32.totalorder %s58, %s61
      %p70 = scmp.eq.s32.totalorder %s41, 3
      %p71 = por %p69, %p70
      %p72 = scmp.ne.s32.totalorder %s61, %s62
      %p73 = scmp.eq.s32.totalorder %s41, 0
      %p74 = por %p72, %p73
      %p75 = scmp.ne.s32.totalorder %s61, %s62
      %p76 = scmp.eq.s32.totalorder %s42, 3
      %p77 = por %p75, %p76
      %p79 = scmp.ne.s32.totalorder %s62, %s78
      %p80 = scmp.eq.s32.totalorder %s42, 0
      %p81 = por %p79, %p80
      %s82 = ssub.s32 %s44, %s51
      %p83 = scmp.eq.s32.totalorder %s82, 0
      %s85 = sadd.s32 %s84, 1
      %s86 = scalar_select %p83, %s84, %s85
      %p89 = pneg %p83
      %p90 = scmp.eq.s32.totalorder %s36, 3
      %p91 = por %p89, %p90
      %p92 = scmp.ne.s32.totalorder %s84, %s87
      %p93 = scmp.eq.s32.totalorder %s36, 0
      %p94 = por %p92, %p93
      %p95 = scmp.ne.s32.totalorder %s84, %s87
      %p96 = scmp.eq.s32.totalorder %s41, 3
      %p97 = por %p95, %p96
      %p98 = scmp.ne.s32.totalorder %s87, %s88
      %p99 = scmp.eq.s32.totalorder %s41, 0
      %p100 = por %p98, %p99
      %p101 = scmp.ne.s32.totalorder %s87, %s88
      %p102 = scmp.eq.s32.totalorder %s42, 3
      %p103 = por %p101, %p102
      %p105 = scmp.ne.s32.totalorder %s88, %s104
      %p106 = scmp.eq.s32.totalorder %s42, 0
      %p107 = por %p105, %p106
      %s108 = ssub.s32 %s44, %s51
      %p109 = scmp.eq.s32.totalorder %s108, 0
      %s111 = sadd.s32 %s110, 1
      %s112 = scalar_select %p109, %s110, %s111
      %p115 = pneg %p109
      %p116 = scmp.eq.s32.totalorder %s36, 3
      %p117 = por %p115, %p116
      %p118 = scmp.ne.s32.totalorder %s110, %s113
      %p119 = scmp.eq.s32.totalorder %s36, 0
      %p120 = por %p118, %p119
      %p121 = scmp.ne.s32.totalorder %s110, %s113
      %p122 = scmp.eq.s32.totalorder %s41, 3
      %p123 = por %p121, %p122
      %p124 = scmp.ne.s32.totalorder %s113, %s114
      %p125 = scmp.eq.s32.totalorder %s41, 0
      %p126 = por %p124, %p125
      %p127 = scmp.ne.s32.totalorder %s113, %s114
      %p128 = scmp.eq.s32.totalorder %s42, 3
      %p129 = por %p127, %p128
      %p131 = scmp.ne.s32.totalorder %s114, %s130
      %p132 = scmp.eq.s32.totalorder %s42, 0
      %p133 = por %p131, %p132
      %s134 = ssub.s32 %s44, %s51
      %p135 = scmp.eq.s32.totalorder %s134, 0
      %s137 = sadd.s32 %s136, 1
      %s138 = scalar_select %p135, %s136, %s137
      %p141 = pneg %p135
      %p142 = scmp.eq.s32.totalorder %s36, 3
      %p143 = por %p141, %p142
      %p144 = scmp.ne.s32.totalorder %s136, %s139
      %p145 = scmp.eq.s32.totalorder %s36, 0
      %p146 = por %p144, %p145
      %p147 = scmp.ne.s32.totalorder %s136, %s139
      %p148 = scmp.eq.s32.totalorder %s41, 3
      %p149 = por %p147, %p148
      %p150 = scmp.ne.s32.totalorder %s139, %s140
      %p151 = scmp.eq.s32.totalorder %s41, 0
      %p152 = por %p150, %p151
      %p153 = scmp.ne.s32.totalorder %s139, %s140
      %p154 = scmp.eq.s32.totalorder %s42, 3
      %p155 = por %p153, %p154
      %p157 = scmp.ne.s32.totalorder %s140, %s156
      %p158 = scmp.eq.s32.totalorder %s42, 0
      %p159 = por %p157, %p158
      %s160 = ssub.s32 %s44, %s51
      %p161 = scmp.eq.s32.totalorder %s160, 0
      %s163 = sadd.s32 %s162, 1
      %s164 = scalar_select %p161, %s162, %s163
      %p167 = pneg %p161
      %p168 = scmp.eq.s32.totalorder %s36, 3
      %p169 = por %p167, %p168
      %p170 = scmp.ne.s32.totalorder %s162, %s165
      %p171 = scmp.eq.s32.totalorder %s36, 0
      %p172 = por %p170, %p171
      %p173 = scmp.ne.s32.totalorder %s162, %s165
      %p174 = scmp.eq.s32.totalorder %s41, 3
      %p175 = por %p173, %p174
      %p176 = scmp.ne.s32.totalorder %s165, %s166
      %p177 = scmp.eq.s32.totalorder %s41, 0
      %p178 = por %p176, %p177
      %p179 = scmp.ne.s32.totalorder %s165, %s166
      %p180 = scmp.eq.s32.totalorder %s42, 3
      %p181 = por %p179, %p180
      %p183 = scmp.ne.s32.totalorder %s166, %s182
      %p184 = scmp.eq.s32.totalorder %s42, 0
      %p185 = por %p183, %p184
      %s186 = ssub.s32 %s44, %s51
      %p187 = scmp.eq.s32.totalorder %s186, 0
      %s189 = sadd.s32 %s188, 1
      %s190 = scalar_select %p187, %s188, %s189
      %p193 = pneg %p187
      %p194 = scmp.eq.s32.totalorder %s36, 3
      %p195 = por %p193, %p194
      %p196 = scmp.ne.s32.totalorder %s188, %s191
      %p197 = scmp.eq.s32.totalorder %s36, 0
      %p198 = por %p196, %p197
      %p199 = scmp.ne.s32.totalorder %s188, %s191
      %p200 = scmp.eq.s32.totalorder %s41, 3
      %p201 = por %p199, %p200
      %p202 = scmp.ne.s32.totalorder %s191, %s192
      %p203 = scmp.eq.s32.totalorder %s41, 0
      %p204 = por %p202, %p203
      %p205 = scmp.ne.s32.totalorder %s191, %s192
      %p206 = scmp.eq.s32.totalorder %s42, 3
      %p207 = por %p205, %p206
      %p209 = scmp.ne.s32.totalorder %s192, %s208
      %p210 = scmp.eq.s32.totalorder %s42, 0
      %p211 = por %p209, %p210
      %s212 = ssub.s32 %s44, %s51
      %p213 = scmp.eq.s32.totalorder %s212, 0
      %s215 = sadd.s32 %s214, 1
      %s216 = scalar_select %p213, %s214, %s215
      %p219 = pneg %p213
      %p220 = scmp.eq.s32.totalorder %s36, 3
      %p221 = por %p219, %p220
      %p222 = scmp.ne.s32.totalorder %s214, %s217
      %p223 = scmp.eq.s32.totalorder %s36, 0
      %p224 = por %p222, %p223
      %p225 = scmp.ne.s32.totalorder %s214, %s217
      %p226 = scmp.eq.s32.totalorder %s41, 3
      %p227 = por %p225, %p226
      %p228 = scmp.ne.s32.totalorder %s217, %s218
      %p229 = scmp.eq.s32.totalorder %s41, 0
      %p230 = por %p228, %p229
      %p231 = scmp.ne.s32.totalorder %s217, %s218
      %p232 = scmp.eq.s32.totalorder %s42, 3
      %p233 = por %p231, %p232
      %p235 = scmp.ne.s32.totalorder %s218, %s234
      %p236 = scmp.eq.s32.totalorder %s42, 0
      %p237 = por %p235, %p236
      %s238 = ssub.s32 %s44, %s51
      %p239 = scmp.eq.s32.totalorder %s238, 0
      %s241 = sadd.s32 %s240, 1
      %s242 = scalar_select %p239, %s240, %s241
      %p245 = pneg %p239
      %p246 = scmp.eq.s32.totalorder %s36, 3
      %p247 = por %p245, %p246
      %p248 = scmp.ne.s32.totalorder %s240, %s243
      %p249 = scmp.eq.s32.totalorder %s36, 0
      %p250 = por %p248, %p249
      %p251 = scmp.ne.s32.totalorder %s240, %s243
      %p252 = scmp.eq.s32.totalorder %s41, 3
      %p253 = por %p251, %p252
      %p254 = scmp.ne.s32.totalorder %s243, %s244
      %p255 = scmp.eq.s32.totalorder %s41, 0
      %p256 = por %p254, %p255
      %p257 = scmp.ne.s32.totalorder %s243, %s244
      %p258 = scmp.eq.s32.totalorder %s42, 3
      %p259 = por %p257, %p258
      %p261 = scmp.ne.s32.totalorder %s244, %s260
      %p262 = scmp.eq.s32.totalorder %s42, 0
      %p263 = por %p261, %p262
      %s264 = ssub.s32 %s44, %s51
      %p265 = scmp.eq.s32.totalorder %s264, 0
      %s267 = sadd.s32 %s266, 1
      %s268 = scalar_select %p265, %s266, %s267
      %p271 = pneg %p265
      %p272 = scmp.eq.s32.totalorder %s36, 3
      %p273 = por %p271, %p272
      %p274 = scmp.ne.s32.totalorder %s266, %s269
      %p275 = scmp.eq.s32.totalorder %s36, 0
      %p276 = por %p274, %p275
      %p277 = scmp.ne.s32.totalorder %s266, %s269
      %p278 = scmp.eq.s32.totalorder %s41, 3
      %p279 = por %p277, %p278
      %p280 = scmp.ne.s32.totalorder %s269, %s270
      %p281 = scmp.eq.s32.totalorder %s41, 0
      %p282 = por %p280, %p281
      %p283 = scmp.ne.s32.totalorder %s269, %s270
      %p284 = scmp.eq.s32.totalorder %s42, 3
      %p285 = por %p283, %p284
      %p287 = scmp.ne.s32.totalorder %s270, %s286
      %p288 = scmp.eq.s32.totalorder %s42, 0
      %p289 = por %p287, %p288
      %s290 = ssub.s32 %s44, %s51
      %p291 = scmp.eq.s32.totalorder %s290, 0
      %s293 = sadd.s32 %s292, 1
      %s294 = scalar_select %p291, %s292, %s293
      %p297 = pneg %p291
      %p298 = scmp.eq.s32.totalorder %s36, 3
      %p299 = por %p297, %p298
      %p300 = scmp.ne.s32.totalorder %s292, %s295
      %p301 = scmp.eq.s32.totalorder %s36, 0
      %p302 = por %p300, %p301
      %p303 = scmp.ne.s32.totalorder %s292, %s295
      %p304 = scmp.eq.s32.totalorder %s41, 3
      %p305 = por %p303, %p304
      %p306 = scmp.ne.s32.totalorder %s295, %s296
      %p307 = scmp.eq.s32.totalorder %s41, 0
      %p308 = por %p306, %p307
      %p309 = scmp.ne.s32.totalorder %s295, %s296
      %p310 = scmp.eq.s32.totalorder %s42, 3
      %p311 = por %p309, %p310
      %p313 = scmp.ne.s32.totalorder %s296, %s312
      %p314 = scmp.eq.s32.totalorder %s42, 0
      %p315 = por %p313, %p314
      %s316 = ssub.s32 %s44, %s51
      %p317 = scmp.eq.s32.totalorder %s316, 0
      %s319 = sadd.s32 %s318, 1
      %s320 = scalar_select %p317, %s318, %s319
      %p323 = pneg %p317
      %p324 = scmp.eq.s32.totalorder %s36, 3
      %p325 = por %p323, %p324
      %p326 = scmp.ne.s32.totalorder %s318, %s321
      %p327 = scmp.eq.s32.totalorder %s36, 0
      %p328 = por %p326, %p327
      %p329 = scmp.ne.s32.totalorder %s318, %s321
      %p330 = scmp.eq.s32.totalorder %s41, 3
      %p331 = por %p329, %p330
      %p332 = scmp.ne.s32.totalorder %s321, %s322
      %p333 = scmp.eq.s32.totalorder %s41, 0
      %p334 = por %p332, %p333
      %p335 = scmp.ne.s32.totalorder %s321, %s322
      %p336 = scmp.eq.s32.totalorder %s42, 3
      %p337 = por %p335, %p336
      %p339 = scmp.ne.s32.totalorder %s322, %s338
      %p340 = scmp.eq.s32.totalorder %s42, 0
      %p341 = por %p339, %p340
      %s342 = ssub.s32 %s44, %s51
      %p343 = scmp.eq.s32.totalorder %s342, 0
      %s345 = sadd.s32 %s344, 1
      %s346 = scalar_select %p343, %s344, %s345
      %p349 = pneg %p343
      %p350 = scmp.eq.s32.totalorder %s36, 3
      %p351 = por %p349, %p350
      %p352 = scmp.ne.s32.totalorder %s344, %s347
      %p353 = scmp.eq.s32.totalorder %s36, 0
      %p354 = por %p352, %p353
      %p355 = scmp.ne.s32.totalorder %s344, %s347
      %p356 = scmp.eq.s32.totalorder %s41, 3
      %p357 = por %p355, %p356
      %p358 = scmp.ne.s32.totalorder %s347, %s348
      %p359 = scmp.eq.s32.totalorder %s41, 0
      %p360 = por %p358, %p359
      %p361 = scmp.ne.s32.totalorder %s347, %s348
      %p362 = scmp.eq.s32.totalorder %s42, 3
      %p363 = por %p361, %p362
      %p365 = scmp.ne.s32.totalorder %s348, %s364
      %p366 = scmp.eq.s32.totalorder %s42, 0
      %p367 = por %p365, %p366
      %s368 = ssub.s32 %s44, %s51
      %p369 = scmp.eq.s32.totalorder %s368, 0
      %s371 = sadd.s32 %s370, 1
      %s372 = scalar_select %p369, %s370, %s371
      %p375 = pneg %p369
      %p376 = scmp.eq.s32.totalorder %s36, 3
      %p377 = por %p375, %p376
      %p378 = scmp.ne.s32.totalorder %s370, %s373
      %p379 = scmp.eq.s32.totalorder %s36, 0
      %p380 = por %p378, %p379
      %p381 = scmp.ne.s32.totalorder %s370, %s373
      %p382 = scmp.eq.s32.totalorder %s41, 3
      %p383 = por %p381, %p382
      %p384 = scmp.ne.s32.totalorder %s373, %s374
      %p385 = scmp.eq.s32.totalorder %s41, 0
      %p386 = por %p384, %p385
      %p387 = scmp.ne.s32.totalorder %s373, %s374
      %p388 = scmp.eq.s32.totalorder %s42, 3
      %p389 = por %p387, %p388
      %p391 = scmp.ne.s32.totalorder %s374, %s390
      %p392 = scmp.eq.s32.totalorder %s42, 0
      %p393 = por %p391, %p392
      %s394 = ssub.s32 %s43, %s55
      %p395 = scmp.eq.s32.totalorder %s394, 0
      %s397 = sadd.s32 %s396, 1
      %s398 = scalar_select %p395, %s396, %s397
      %p401 = pneg %p395
      %p402 = scmp.eq.s32.totalorder %s36, 3
      %p403 = por %p401, %p402
      %p404 = scmp.ne.s32.totalorder %s396, %s399
      %p405 = scmp.eq.s32.totalorder %s36, 0
      %p406 = por %p404, %p405
      %p407 = scmp.ne.s32.totalorder %s396, %s399
      %p408 = scmp.eq.s32.totalorder %s41, 3
      %p409 = por %p407, %p408
      %p410 = scmp.ne.s32.totalorder %s399, %s400
      %p411 = scmp.eq.s32.totalorder %s41, 0
      %p412 = por %p410, %p411
      %p413 = scmp.ne.s32.totalorder %s399, %s400
      %p414 = scmp.eq.s32.totalorder %s42, 3
      %p415 = por %p413, %p414
      %p417 = scmp.ne.s32.totalorder %s400, %s416
      %p418 = scmp.eq.s32.totalorder %s42, 0
      %p419 = por %p417, %p418
      %s420 = ssub.s32 %s43, %s55
      %p421 = scmp.eq.s32.totalorder %s420, 0
      %s423 = sadd.s32 %s422, 1
      %s424 = scalar_select %p421, %s422, %s423
      %p427 = pneg %p421
      %p428 = scmp.eq.s32.totalorder %s36, 3
      %p429 = por %p427, %p428
      %p430 = scmp.ne.s32.totalorder %s422, %s425
      %p431 = scmp.eq.s32.totalorder %s36, 0
      %p432 = por %p430, %p431
      %p433 = scmp.ne.s32.totalorder %s422, %s425
      %p434 = scmp.eq.s32.totalorder %s41, 3
      %p435 = por %p433, %p434
      %p436 = scmp.ne.s32.totalorder %s425, %s426
      %p437 = scmp.eq.s32.totalorder %s41, 0
      %p438 = por %p436, %p437
      %p439 = scmp.ne.s32.totalorder %s425, %s426
      %p440 = scmp.eq.s32.totalorder %s42, 3
      %p441 = por %p439, %p440
      %p443 = scmp.ne.s32.totalorder %s426, %s442
      %p444 = scmp.eq.s32.totalorder %s42, 0
      %p445 = por %p443, %p444
      %p446 = scmp.le.s32.totalorder 1, %s36
      %p447 = scmp.lt.s32.totalorder %s36, 5
      %p448 = pnand %p446, %p447
      %p449 = pneg %p448
      // Predicated region
      $region9: #{tpu_custom_call.1} parent=5 // pred_check
        _
      $region10: #{tpu_custom_call.1} parent=5 // pred_check_branch
        %451 = sbr.rel (%p448) target = $region12
      $region11: #{tpu_custom_call.1} parent=5 // pred_region
        %s452 = ssub.s32 %s36, 1
      $region12: #{tpu_custom_call.1} parent=5 // pred_fallthru
        _
      %p453 = scmp.lt.s32.totalorder %s36, 4
      // Predicated region
      $region13: #{tpu_custom_call.1} parent=5 // pred_check
        %p454 = pneg %p453
      $region14: #{tpu_custom_call.1} parent=5 // pred_check_branch
        %456 = sbr.rel (%p454) target = $region16
      $region15: #{tpu_custom_call.1} parent=5 // pred_region
        // Predicated region
        $region17: #{tpu_custom_call.1} parent=15 // pred_check
          %p457 = pneg %p68
        $region18: #{tpu_custom_call.1} parent=15 // pred_check_branch
          %459 = sbr.rel (%p457) target = $region20
        $region19: #{tpu_custom_call.1} parent=15 // pred_region
          %s460 = sand.u32 %s58, 1
          %s461 = scalar_lea.sflag [#allocation5], %s460
          %s462 = sand.u32 %s58, 1
          %s463 = smul.addr %s462, 8
          %s464 = scalar_lea.vmem [#allocation4], %s463
          %s466 = ssub.s32 128, 128
          %467 = vsyncadd %s461, %s466
          %s468 = smul.addr %s43, 128
          %s469 = scalar_lea.hbm %s0, %s468
          %s471 = sshll.u32 %s464, 4
          %s472 = int_to_ptr.vmem [resolvable:$true] %s471
          %474 = dma.hbm_to_vmem [thread:$0]  %s469, 128, %s472, %s461
        $region20: #{tpu_custom_call.1} parent=15 // pred_fallthru
          _
        // Predicated region
        $region21: #{tpu_custom_call.1} parent=15 // pred_check
          %p475 = pneg %p94
        $region22: #{tpu_custom_call.1} parent=15 // pred_check_branch
          %477 = sbr.rel (%p475) target = $region24
        $region23: #{tpu_custom_call.1} parent=15 // pred_region
          %p478 = scmp.lt.s32.totalorder %s44, 1
          %s479 = scalar_select %p478, %s44, 1
          %s480 = scalar_lea.vmem %s1, %s479
        $region24: #{tpu_custom_call.1} parent=15 // pred_fallthru
          _
        // Predicated region
        $region25: #{tpu_custom_call.1} parent=15 // pred_check
          %p481 = pneg %p120
        $region26: #{tpu_custom_call.1} parent=15 // pred_check_branch
          %483 = sbr.rel (%p481) target = $region28
        $region27: #{tpu_custom_call.1} parent=15 // pred_region
          %p484 = scmp.lt.s32.totalorder %s44, 1
          %s485 = scalar_select %p484, %s44, 1
          %s486 = scalar_lea.vmem %s2, %s485
        $region28: #{tpu_custom_call.1} parent=15 // pred_fallthru
          _
        // Predicated region
        $region29: #{tpu_custom_call.1} parent=15 // pred_check
          %p487 = pneg %p146
        $region30: #{tpu_custom_call.1} parent=15 // pred_check_branch
          %489 = sbr.rel (%p487) target = $region32
        $region31: #{tpu_custom_call.1} parent=15 // pred_region
          %p490 = scmp.lt.s32.totalorder %s44, 1
          %s491 = scalar_select %p490, %s44, 1
          %s492 = smul.addr %s491, 4
          %s493 = smul.addr %s492, 4
          %s494 = scalar_lea.vmem %s3, %s493
        $region32: #{tpu_custom_call.1} parent=15 // pred_fallthru
          _
        // Predicated region
        $region33: #{tpu_custom_call.1} parent=15 // pred_check
          %p495 = pneg %p172
        $region34: #{tpu_custom_call.1} parent=15 // pred_check_branch
          %497 = sbr.rel (%p495) target = $region36
        $region35: #{tpu_custom_call.1} parent=15 // pred_region
          %p498 = scmp.lt.s32.totalorder %s44, 1
          %s499 = scalar_select %p498, %s44, 1
          %s500 = scalar_lea.vmem %s4, %s499
        $region36: #{tpu_custom_call.1} parent=15 // pred_fallthru
          _
        // Predicated region
        $region37: #{tpu_custom_call.1} parent=15 // pred_check
          %p501 = pneg %p198
        $region38: #{tpu_custom_call.1} parent=15 // pred_check_branch
          %503 = sbr.rel (%p501) target = $region40
        $region39: #{tpu_custom_call.1} parent=15 // pred_region
          %p504 = scmp.lt.s32.totalorder %s44, 1
          %s505 = scalar_select %p504, %s44, 1
          %s506 = smul.addr %s505, 4
          %s507 = smul.addr %s506, 4
          %s508 = scalar_lea.vmem %s5, %s507
        $region40: #{tpu_custom_call.1} parent=15 // pred_fallthru
          _
        // Predicated region
        $region41: #{tpu_custom_call.1} parent=15 // pred_check
          %p509 = pneg %p224
        $region42: #{tpu_custom_call.1} parent=15 // pred_check_branch
          %511 = sbr.rel (%p509) target = $region44
        $region43: #{tpu_custom_call.1} parent=15 // pred_region
          %p512 = scmp.lt.s32.totalorder %s44, 1
          %s513 = scalar_select %p512, %s44, 1
          %s514 = scalar_lea.vmem %s6, %s513
        $region44: #{tpu_custom_call.1} parent=15 // pred_fallthru
          _
        // Predicated region
        $region45: #{tpu_custom_call.1} parent=15 // pred_check
          %p515 = pneg %p250
        $region46: #{tpu_custom_call.1} parent=15 // pred_check_branch
          %517 = sbr.rel (%p515) target = $region48
        $region47: #{tpu_custom_call.1} parent=15 // pred_region
          %s518 = sand.u32 %s36, 1
          %s519 = scalar_lea.sflag [#allocation8], %s518
          %s520 = sand.u32 %s240, 1
          %s521 = scalar_lea.vmem [#allocation7], %s520
          %s523 = ssub.s32 16, 16
          %524 = vsyncadd %s519, %s523
          %s525 = smul.addr %s44, 16
          %s526 = scalar_lea.hbm %s7, %s525
          %s528 = sshll.u32 %s521, 4
          %s529 = int_to_ptr.vmem [resolvable:$true] %s528
          %531 = dma.hbm_to_vmem [thread:$0]  %s526, 16, %s529, %s519
        $region48: #{tpu_custom_call.1} parent=15 // pred_fallthru
          _
        // Predicated region
        $region49: #{tpu_custom_call.1} parent=15 // pred_check
          %p532 = pneg %p276
        $region50: #{tpu_custom_call.1} parent=15 // pred_check_branch
          %534 = sbr.rel (%p532) target = $region52
        $region51: #{tpu_custom_call.1} parent=15 // pred_region
          %s535 = sand.u32 %s36, 1
          %s536 = scalar_lea.sflag [#allocation8], %s535
          %s537 = sand.u32 %s266, 1
          %s538 = scalar_lea.vmem [#allocation9], %s537
          %s540 = ssub.s32 16, 16
          %541 = vsyncadd %s536, %s540
          %s542 = smul.addr %s44, 16
          %s543 = scalar_lea.hbm %s8, %s542
          %s545 = sshll.u32 %s538, 4
          %s546 = int_to_ptr.vmem [resolvable:$true] %s545
          %548 = dma.hbm_to_vmem [thread:$0]  %s543, 16, %s546, %s536
        $region52: #{tpu_custom_call.1} parent=15 // pred_fallthru
          _
        // Predicated region
        $region53: #{tpu_custom_call.1} parent=15 // pred_check
          %p549 = pneg %p302
        $region54: #{tpu_custom_call.1} parent=15 // pred_check_branch
          %551 = sbr.rel (%p549) target = $region56
        $region55: #{tpu_custom_call.1} parent=15 // pred_region
          %p552 = scmp.lt.s32.totalorder %s44, 1
          %s553 = scalar_select %p552, %s44, 1
          %s554 = smul.addr %s553, 4
          %s555 = smul.addr %s554, 4
          %s556 = scalar_lea.vmem %s9, %s555
        $region56: #{tpu_custom_call.1} parent=15 // pred_fallthru
          _
        // Predicated region
        $region57: #{tpu_custom_call.1} parent=15 // pred_check
          %p557 = pneg %p328
        $region58: #{tpu_custom_call.1} parent=15 // pred_check_branch
          %559 = sbr.rel (%p557) target = $region60
        $region59: #{tpu_custom_call.1} parent=15 // pred_region
          %s560 = sand.u32 %s318, 1
          %s561 = scalar_lea.sflag [#allocation11], %s560
          %s562 = sand.u32 %s318, 1
          %s563 = scalar_lea.vmem [#allocation10], %s562
          %s565 = ssub.s32 16, 16
          %566 = vsyncadd %s561, %s565
          %s567 = smul.addr %s44, 16
          %s568 = scalar_lea.hbm %s10, %s567
          %s570 = sshll.u32 %s563, 4
          %s571 = int_to_ptr.vmem [resolvable:$true] %s570
          %573 = dma.hbm_to_vmem [thread:$0]  %s568, 16, %s571, %s561
        $region60: #{tpu_custom_call.1} parent=15 // pred_fallthru
          _
        // Predicated region
        $region61: #{tpu_custom_call.1} parent=15 // pred_check
          %p574 = pneg %p354
        $region62: #{tpu_custom_call.1} parent=15 // pred_check_branch
          %576 = sbr.rel (%p574) target = $region64
        $region63: #{tpu_custom_call.1} parent=15 // pred_region
          %p577 = scmp.lt.s32.totalorder %s44, 1
          %s578 = scalar_select %p577, %s44, 1
          %s579 = smul.addr %s578, 8
          %s580 = smul.addr %s579, 4
          %s581 = scalar_lea.vmem %s11, %s580
        $region64: #{tpu_custom_call.1} parent=15 // pred_fallthru
          _
        // Predicated region
        $region65: #{tpu_custom_call.1} parent=15 // pred_check
          %p582 = pneg %p380
        $region66: #{tpu_custom_call.1} parent=15 // pred_check_branch
          %584 = sbr.rel (%p582) target = $region68
        $region67: #{tpu_custom_call.1} parent=15 // pred_region
          %p585 = scmp.lt.s32.totalorder %s44, 1
          %s586 = scalar_select %p585, %s44, 1
          %s587 = scalar_lea.vmem %s12, %s586
        $region68: #{tpu_custom_call.1} parent=15 // pred_fallthru
          _
      $region16: #{tpu_custom_call.1} parent=5 // pred_fallthru
        _
      %p588 = scmp.le.s32.totalorder 1, %s36
      %p589 = scmp.lt.s32.totalorder %s36, 5
      %p590 = pnand %p588, %p589
      %p591 = pneg %p590
      // Predicated region
      $region69: #{tpu_custom_call.1} parent=5 // pred_check
        _
      $region70: #{tpu_custom_call.1} parent=5 // pred_check_branch
        %593 = sbr.rel (%p590) target = $region72
      $region71: #{tpu_custom_call.1} parent=5 // pred_region
        %s594 = ssub.s32 %s36, 1
        %s595 = sand.u32 %s61, 1
        %s596 = scalar_lea.sflag [#allocation5], %s595
        %s597 = sand.u32 %s61, 1
        %s598 = smul.addr %s597, 8
        %s599 = scalar_lea.vmem [#allocation4], %s598
        // Predicated region
        $region73: #{tpu_custom_call.1} parent=71 // pred_check
          %p600 = pneg %p74
        $region74: #{tpu_custom_call.1} parent=71 // pred_check_branch
          %602 = sbr.rel (%p600) target = $region76
        $region75: #{tpu_custom_call.1} parent=71 // pred_region
          %603 = dma.done %s596, 128
        $region76: #{tpu_custom_call.1} parent=71 // pred_fallthru
          _
        %s604 = sand.u32 %s41, 1
        %s605 = scalar_lea.sflag [#allocation8], %s604
        %s606 = sand.u32 %s243, 1
        %s607 = scalar_lea.vmem [#allocation7], %s606
        // Predicated region
        $region77: #{tpu_custom_call.1} parent=71 // pred_check
          %p608 = pneg %p256
        $region78: #{tpu_custom_call.1} parent=71 // pred_check_branch
          %610 = sbr.rel (%p608) target = $region80
        $region79: #{tpu_custom_call.1} parent=71 // pred_region
          %611 = dma.done %s605, 16
        $region80: #{tpu_custom_call.1} parent=71 // pred_fallthru
          _
        %s612 = sand.u32 %s41, 1
        %s613 = scalar_lea.sflag [#allocation8], %s612
        %s614 = sand.u32 %s269, 1
        %s615 = scalar_lea.vmem [#allocation9], %s614
        // Predicated region
        $region81: #{tpu_custom_call.1} parent=71 // pred_check
          %p616 = pneg %p282
        $region82: #{tpu_custom_call.1} parent=71 // pred_check_branch
          %618 = sbr.rel (%p616) target = $region84
        $region83: #{tpu_custom_call.1} parent=71 // pred_region
          %619 = dma.done %s613, 16
        $region84: #{tpu_custom_call.1} parent=71 // pred_fallthru
          _
        %s620 = sand.u32 %s321, 1
        %s621 = scalar_lea.sflag [#allocation11], %s620
        %s622 = sand.u32 %s321, 1
        %s623 = scalar_lea.vmem [#allocation10], %s622
        // Predicated region
        $region85: #{tpu_custom_call.1} parent=71 // pred_check
          %p624 = pneg %p334
        $region86: #{tpu_custom_call.1} parent=71 // pred_check_branch
          %626 = sbr.rel (%p624) target = $region88
        $region87: #{tpu_custom_call.1} parent=71 // pred_region
          %627 = dma.done %s621, 16
        $region88: #{tpu_custom_call.1} parent=71 // pred_fallthru
          _
        %s628 = sand.u32 %s61, 1
        %s629 = scalar_lea.sflag [#allocation5], %s628
        %s630 = sand.u32 %s61, 1
        %s631 = smul.addr %s630, 8
        %s632 = scalar_lea.vmem [#allocation4], %s631
        %p633 = pneg %p74
        %p634 = pneg %p71
        %p635 = scmp.lt.s32.totalorder %s46, 1
        %s636 = scalar_select %p635, %s46, 1
        %s637 = scalar_lea.vmem %s1, %s636
        %p638 = pneg %p100
        %p639 = pneg %p97
        %p640 = scmp.lt.s32.totalorder %s46, 1
        %s641 = scalar_select %p640, %s46, 1
        %s642 = scalar_lea.vmem %s2, %s641
        %p643 = pneg %p126
        %p644 = pneg %p123
        %p645 = scmp.lt.s32.totalorder %s46, 1
        %s646 = scalar_select %p645, %s46, 1
        %s647 = smul.addr %s646, 4
        %s648 = smul.addr %s647, 4
        %s649 = scalar_lea.vmem %s3, %s648
        %p650 = pneg %p152
        %p651 = pneg %p149
        %p652 = scmp.lt.s32.totalorder %s46, 1
        %s653 = scalar_select %p652, %s46, 1
        %s654 = scalar_lea.vmem %s4, %s653
        %p655 = pneg %p178
        %p656 = pneg %p175
        %p657 = scmp.lt.s32.totalorder %s46, 1
        %s658 = scalar_select %p657, %s46, 1
        %s659 = smul.addr %s658, 4
        %s660 = smul.addr %s659, 4
        %s661 = scalar_lea.vmem %s5, %s660
        %p662 = pneg %p204
        %p663 = pneg %p201
        %p664 = scmp.lt.s32.totalorder %s46, 1
        %s665 = scalar_select %p664, %s46, 1
        %s666 = scalar_lea.vmem %s6, %s665
        %p667 = pneg %p230
        %p668 = pneg %p227
        %s669 = sand.u32 %s41, 1
        %s670 = scalar_lea.sflag [#allocation8], %s669
        %s671 = sand.u32 %s243, 1
        %s672 = scalar_lea.vmem [#allocation7], %s671
        %p673 = pneg %p256
        %p674 = pneg %p253
        %s675 = sand.u32 %s41, 1
        %s676 = scalar_lea.sflag [#allocation8], %s675
        %s677 = sand.u32 %s269, 1
        %s678 = scalar_lea.vmem [#allocation9], %s677
        %p679 = pneg %p282
        %p680 = pneg %p279
        %p681 = scmp.lt.s32.totalorder %s46, 1
        %s682 = scalar_select %p681, %s46, 1
        %s683 = smul.addr %s682, 4
        %s684 = smul.addr %s683, 4
        %s685 = scalar_lea.vmem %s9, %s684
        %p686 = pneg %p308
        %p687 = pneg %p305
        %s688 = sand.u32 %s321, 1
        %s689 = scalar_lea.sflag [#allocation11], %s688
        %s690 = sand.u32 %s321, 1
        %s691 = scalar_lea.vmem [#allocation10], %s690
        %p692 = pneg %p334
        %p693 = pneg %p331
        %p694 = scmp.lt.s32.totalorder %s46, 1
        %s695 = scalar_select %p694, %s46, 1
        %s696 = smul.addr %s695, 8
        %s697 = smul.addr %s696, 4
        %s698 = scalar_lea.vmem %s11, %s697
        %p699 = pneg %p360
        %p700 = pneg %p357
        %p701 = scmp.lt.s32.totalorder %s46, 1
        %s702 = scalar_select %p701, %s46, 1
        %s703 = scalar_lea.vmem %s12, %s702
        %p704 = pneg %p386
        %p705 = pneg %p383
        %p706 = pneg %p412
        %p707 = pneg %p409
        %s708 = sand.u32 %s399, 1
        %s709 = scalar_lea.sflag [#allocation6], %s708
        %s710 = sand.u32 %s399, 1
        %s711 = smul.addr %s710, 8
        %s712 = scalar_lea.vmem [#allocation12], %s711
        %p713 = pneg %p438
        %p714 = pneg %p435
        %s715 = sand.u32 %s425, 1
        %s716 = scalar_lea.sflag [#allocation14], %s715
        %s717 = sand.u32 %s425, 1
        %s718 = smul.addr %s717, 8
        %s719 = scalar_lea.vmem [#allocation13], %s718
        %p720 = scmp.lt.s32.totalorder %s46, 1
        %s721 = scalar_select %p720, %s46, 1
        %s722 = scalar_lea.vmem %s1, %s721
        %p723 = scmp.lt.s32.totalorder %s46, 1
        %s724 = scalar_select %p723, %s46, 1
        %s725 = scalar_lea.vmem %s2, %s724
        %p726 = scmp.lt.s32.totalorder %s46, 1
        %s727 = scalar_select %p726, %s46, 1
        %s728 = smul.addr %s727, 4
        %s729 = smul.addr %s728, 4
        %s730 = scalar_lea.vmem %s3, %s729
        %p731 = scmp.lt.s32.totalorder %s46, 1
        %s732 = scalar_select %p731, %s46, 1
        %s733 = scalar_lea.vmem %s4, %s732
        %p734 = scmp.lt.s32.totalorder %s46, 1
        %s735 = scalar_select %p734, %s46, 1
        %s736 = smul.addr %s735, 4
        %s737 = smul.addr %s736, 4
        %s738 = scalar_lea.vmem %s5, %s737
        %p739 = scmp.lt.s32.totalorder %s46, 1
        %s740 = scalar_select %p739, %s46, 1
        %s741 = scalar_lea.vmem %s6, %s740
        %p742 = scmp.lt.s32.totalorder %s46, 1
        %s743 = scalar_select %p742, %s46, 1
        %s744 = smul.addr %s743, 4
        %s745 = smul.addr %s744, 4
        %s746 = scalar_lea.vmem %s9, %s745
        %p747 = scmp.lt.s32.totalorder %s46, 1
        %s748 = scalar_select %p747, %s46, 1
        %s749 = smul.addr %s748, 8
        %s750 = smul.addr %s749, 4
        %s751 = scalar_lea.vmem %s11, %s750
        %p752 = scmp.lt.s32.totalorder %s46, 1
        %s753 = scalar_select %p752, %s46, 1
        %s754 = scalar_lea.vmem %s12, %s753
        %p756 = scmp.eq.s32.totalorder %s46, 0
        // Predicated region
        $region89: #{tpu_custom_call.1} parent=71 // pred_check
          %p757 = pneg %p756
        $region90: #{tpu_custom_call.1} parent=71 // pred_check_branch
          %759 = sbr.rel (%p757) target = $region92
        $region91: #{tpu_custom_call.1} parent=71 // pred_region
          %v760 = vld [vmem:[%s599] sm:$0xff]
          %vm761 = vcmask 261120
          %762 = vst.msk [vmem:[#allocation2] sm:$0xff] %vm761, %v760
        $region92: #{tpu_custom_call.1} parent=71 // pred_fallthru
          _
        %v763 = vld [vmem:[#allocation2] sm:$0xff]
        %v764 = vld [vmem:[%s722] sm:$0x1]
        %v765 = vld [vmem:[%s725] sm:$0x1]
        %vm766 = vcmask 261120
        %v767 = vsel %vm766, %v763, 0.0
        %768 = vadd.xlane.f32.xlu0 %v767
        %v769 = vpop.xlane.xlu0 %768
        %v770 = vrcp.pop 32.0
        %v771 = vmul.f32 %v769, %v770
        %v772 = vsub.f32 %v763, %v771
        %v773 = vmul.f32 %v772, %v772
        %v774 = vsel %vm766, %v773, 0.0
        %775 = vadd.xlane.f32.xlu0 %v774
        %v776 = vpop.xlane.xlu0 %775
        %v777 = vmul.f32 %v776, %v770
        %v778 = vadd.f32 %v777, 1e-05
        %v779 = vrsqrt.pop %v778
        %v780 = vmul.f32 %v772, %v779
        %v782 = vlaneseq
        %v783 = vshrl.u32 %v782, 7
        %v784 = vsub.s32 0, %v783
        %v785 = vrot.slane %v764, %v784
        %v787 = vmul.f32 %v780, %v785
        %v789 = vlaneseq
        %v790 = vshrl.u32 %v789, 7
        %v791 = vsub.s32 0, %v790
        %v792 = vrot.slane %v765, %v791
        %v794 = vadd.f32 %v787, %v792
        %v795 = vpack.c.bf16 %v794, %v794
        %v796 = vld [vmem:[%s730] sm:$0xf]
        %v797 = vld [vmem:[%s730 + $0x4] sm:$0xf]
        %v798 = vld [vmem:[%s730 + $0x8] sm:$0xf]
        %v799 = vld [vmem:[%s730 + $0xc] sm:$0xf]
        %v800 = vld [vmem:[%s733] sm:$0x1]
        %v802 = vlaneseq
        %v803 = vshrl.u32 %v802, 7
        %v804 = vsub.s32 0, %v803
        %v805 = vrot.slane %v800, %v804
        %v811 = vunpack.c.l.b16 %v796
        %v812 = vunpack.c.l.b16 %v797
        %v813 = vunpack.c.l.b16 %v798
        %v814 = vunpack.c.l.b16 %v799
        %v815 = vpack.c.b16 %v812, %v811
        %v816 = vpack.c.b16 %v814, %v813
        %v820 = vsel %vm766, %v795, 0
        %822 = vmatprep.subr.bf16.mxu0 0
        %823 = vmatpush1.bf16.msra.mxu0 %v815
        %824 = vmatprep.subr.bf16.mxu0 0
        %825 = vmatpush1.bf16.msra.mxu0 %v816
        %826 = vmatprep.subr.bf16.mxu0 0
        %827 = vmatpush1.bf16.msra.mxu0 0
        %828 = vmatprep.subr.bf16.mxu0 0
        %829 = vmatpush1.bf16.msra.mxu0 0
        %830 = vmatprep.subr.bf16.mxu0 0
        %831 = vmatpush1.bf16.msra.mxu0 0
        %832 = vmatprep.subr.bf16.mxu0 0
        %833 = vmatpush1.bf16.msra.mxu0 0
        %834 = vmatprep.subr.bf16.mxu0 0
        %835 = vmatpush1.bf16.msra.mxu0 0
        %836 = vmatprep.subr.bf16.mxu0 0
        %837 = vmatpush1.bf16.msra.mxu0 0
        %838 = vmatprep.subr.bf16.mxu0 0
        %839 = vmatpush1.bf16.msra.mxu0 0
        %840 = vmatprep.subr.bf16.mxu0 0
        %841 = vmatpush1.bf16.msra.mxu0 0
        %842 = vmatprep.subr.bf16.mxu0 0
        %843 = vmatpush1.bf16.msra.mxu0 0
        %844 = vmatprep.subr.bf16.mxu0 0
        %845 = vmatpush1.bf16.msra.mxu0 0
        %846 = vmatprep.subr.bf16.mxu0 0
        %847 = vmatpush1.bf16.msra.mxu0 0
        %848 = vmatprep.subr.bf16.mxu0 0
        %849 = vmatpush1.bf16.msra.mxu0 0
        %850 = vmatprep.subr.bf16.mxu0 0
        %851 = vmatpush1.bf16.msra.mxu0 0
        %852 = vmatprep.subr.bf16.mxu0 0
        %853 = vmatpush1.bf16.msra.mxu0 0
        %854 = vmatprep.mubr.bf16.mxu0 0
        %855 = vmatmul.mubr.bf16.gmra.mrb[0].mxu0 %v820
        %v856 = vpop.f32.mrb[0].mxu0
        %v857 = vadd.f32 %v805, %v856
        %v858 = vpop.f32.mrb[0].mxu0
        %v859 = vpop.f32.mrb[0].mxu0
        %v860 = vpop.f32.mrb[0].mxu0
        %861 = vdwg.mxu0
        %v862 = vpack.c.bf16 %v857, %v857
        %864 = vrot.lane.b32.xlu0 %v862, 96
        %v865 = vpop.permute.xlu0 %864
        %vm866 = vcmask 64512
        %v868 = vsel %vm866, %v862, 0
        %v871 = vsel %vm866, %v865, 0
        %873 = vmatprep.subr.bf16.mxu0 0
        %874 = vmatpush1.bf16.xpose.msra.mxu0 %v871
        %875 = vmatprep.subr.bf16.mxu0 0
        %876 = vmatpush1.bf16.xpose.msra.mxu0 0
        %877 = vmatprep.subr.bf16.mxu0 0
        %878 = vmatpush1.bf16.xpose.msra.mxu0 0
        %879 = vmatprep.subr.bf16.mxu0 0
        %880 = vmatpush1.bf16.xpose.msra.mxu0 0
        %881 = vmatprep.subr.bf16.mxu0 0
        %882 = vmatpush1.bf16.xpose.msra.mxu0 0
        %883 = vmatprep.subr.bf16.mxu0 0
        %884 = vmatpush1.bf16.xpose.msra.mxu0 0
        %885 = vmatprep.subr.bf16.mxu0 0
        %886 = vmatpush1.bf16.xpose.msra.mxu0 0
        %887 = vmatprep.subr.bf16.mxu0 0
        %888 = vmatpush1.bf16.xpose.msra.mxu0 0
        %889 = vmatprep.subr.bf16.mxu0 0
        %890 = vmatpush1.bf16.xpose.msra.mxu0 0
        %891 = vmatprep.subr.bf16.mxu0 0
        %892 = vmatpush1.bf16.xpose.msra.mxu0 0
        %893 = vmatprep.subr.bf16.mxu0 0
        %894 = vmatpush1.bf16.xpose.msra.mxu0 0
        %895 = vmatprep.subr.bf16.mxu0 0
        %896 = vmatpush1.bf16.xpose.msra.mxu0 0
        %897 = vmatprep.subr.bf16.mxu0 0
        %898 = vmatpush1.bf16.xpose.msra.mxu0 0
        %899 = vmatprep.subr.bf16.mxu0 0
        %900 = vmatpush1.bf16.xpose.msra.mxu0 0
        %901 = vmatprep.subr.bf16.mxu0 0
        %902 = vmatpush1.bf16.xpose.msra.mxu0 0
        %903 = vmatprep.subr.bf16.mxu0 0
        %904 = vmatpush1.bf16.xpose.msra.mxu0 0
        %905 = vmatprep.mubr.bf16.mxu0 0
        %906 = vmatmul.mubr.bf16.gmra.mrb[0].mxu0 %v868
        %v907 = vpop.f32.mrb[0].mxu0
        %v908 = vadd.f32 0.0, %v907
        %v909 = vpop.f32.mrb[0].mxu0
        %v910 = vpop.f32.mrb[0].mxu0
        %v911 = vpop.f32.mrb[0].mxu0
        %912 = vdwg.mxu0
        %v913 = vmul.f32 %v908, 0.35355338
        %v914 = vsel %vm866, %v913, -inf
        %915 = vmax.xlane.f32.xlu0 %v914
        %v916 = vpop.xlane.xlu0 %915
        %v917 = vsub.f32 %v913, %v916
        %v918 = vmul.f32 %v917, 1.442695
        %v919 = vpow.pop %v918
        %v920 = vsel %vm866, %v919, 0.0
        %921 = vadd.xlane.f32.xlu0 %v920
        %v922 = vpop.xlane.xlu0 %921
        %v923 = vrcp.pop %v922
        %v924 = vmul.f32 1.0, %v923
        %v925 = vmul.f32 %v919, %v924
        %v926 = vadd.f32 %v925, 0.0
        %v927 = vpack.c.bf16 %v925, %v925
        %928 = vrot.lane.b32.xlu0 %v862, 64
        %v929 = vpop.permute.xlu0 %928
        %v931 = vsel %vm866, %v927, 0
        %vm933 = vcmask 1043456
        %v935 = vsel %vm933, %v929, 0
        %937 = vmatprep.subr.bf16.mxu0 0
        %938 = vmatpush1.bf16.msra.mxu0 %v935
        %939 = vmatprep.subr.bf16.mxu0 0
        %940 = vmatpush1.bf16.msra.mxu0 0
        %941 = vmatprep.subr.bf16.mxu0 0
        %942 = vmatpush1.bf16.msra.mxu0 0
        %943 = vmatprep.subr.bf16.mxu0 0
        %944 = vmatpush1.bf16.msra.mxu0 0
        %945 = vmatprep.subr.bf16.mxu0 0
        %946 = vmatpush1.bf16.msra.mxu0 0
        %947 = vmatprep.subr.bf16.mxu0 0
        %948 = vmatpush1.bf16.msra.mxu0 0
        %949 = vmatprep.subr.bf16.mxu0 0
        %950 = vmatpush1.bf16.msra.mxu0 0
        %951 = vmatprep.subr.bf16.mxu0 0
        %952 = vmatpush1.bf16.msra.mxu0 0
        %953 = vmatprep.subr.bf16.mxu0 0
        %954 = vmatpush1.bf16.msra.mxu0 0
        %955 = vmatprep.subr.bf16.mxu0 0
        %956 = vmatpush1.bf16.msra.mxu0 0
        %957 = vmatprep.subr.bf16.mxu0 0
        %958 = vmatpush1.bf16.msra.mxu0 0
        %959 = vmatprep.subr.bf16.mxu0 0
        %960 = vmatpush1.bf16.msra.mxu0 0
        %961 = vmatprep.subr.bf16.mxu0 0
        %962 = vmatpush1.bf16.msra.mxu0 0
        %963 = vmatprep.subr.bf16.mxu0 0
        %964 = vmatpush1.bf16.msra.mxu0 0
        %965 = vmatprep.subr.bf16.mxu0 0
        %966 = vmatpush1.bf16.msra.mxu0 0
        %967 = vmatprep.subr.bf16.mxu0 0
        %968 = vmatpush1.bf16.msra.mxu0 0
        %969 = vmatprep.mubr.bf16.mxu0 0
        %970 = vmatmul.mubr.bf16.gmra.mrb[0].mxu0 %v931
        %v971 = vpop.f32.mrb[0].mxu0
        %v972 = vadd.f32 0.0, %v971
        %v973 = vpop.f32.mrb[0].mxu0
        %v974 = vpop.f32.mrb[0].mxu0
        %v975 = vpop.f32.mrb[0].mxu0
        %976 = vdwg.mxu0
        %v977 = vpack.c.bf16 %v972, %v972
        %vm978 = vcmask 60416
        %979 = vst.msk [vmem:[#allocation3] sm:$0xf] %vm978, %v977
        %980 = vrot.lane.b32.xlu0 %v862, 120
        %v981 = vpop.permute.xlu0 %980
        %982 = vrot.lane.b32.xlu0 %v862, 88
        %v983 = vpop.permute.xlu0 %982
        %v985 = vsel %vm866, %v981, 0
        %v988 = vsel %vm866, %v983, 0
        %990 = vmatprep.subr.bf16.mxu0 0
        %991 = vmatpush1.bf16.xpose.msra.mxu0 %v988
        %992 = vmatprep.subr.bf16.mxu0 0
        %993 = vmatpush1.bf16.xpose.msra.mxu0 0
        %994 = vmatprep.subr.bf16.mxu0 0
        %995 = vmatpush1.bf16.xpose.msra.mxu0 0
        %996 = vmatprep.subr.bf16.mxu0 0
        %997 = vmatpush1.bf16.xpose.msra.mxu0 0
        %998 = vmatprep.subr.bf16.mxu0 0
        %999 = vmatpush1.bf16.xpose.msra.mxu0 0
        %1000 = vmatprep.subr.bf16.mxu0 0
        %1001 = vmatpush1.bf16.xpose.msra.mxu0 0
        %1002 = vmatprep.subr.bf16.mxu0 0
        %1003 = vmatpush1.bf16.xpose.msra.mxu0 0
        %1004 = vmatprep.subr.bf16.mxu0 0
        %1005 = vmatpush1.bf16.xpose.msra.mxu0 0
        %1006 = vmatprep.subr.bf16.mxu0 0
        %1007 = vmatpush1.bf16.xpose.msra.mxu0 0
        %1008 = vmatprep.subr.bf16.mxu0 0
        %1009 = vmatpush1.bf16.xpose.msra.mxu0 0
        %1010 = vmatprep.subr.bf16.mxu0 0
        %1011 = vmatpush1.bf16.xpose.msra.mxu0 0
        %1012 = vmatprep.subr.bf16.mxu0 0
        %1013 = vmatpush1.bf16.xpose.msra.mxu0 0
        %1014 = vmatprep.subr.bf16.mxu0 0
        %1015 = vmatpush1.bf16.xpose.msra.mxu0 0
        %1016 = vmatprep.subr.bf16.mxu0 0
        %1017 = vmatpush1.bf16.xpose.msra.mxu0 0
        %1018 = vmatprep.subr.bf16.mxu0 0
        %1019 = vmatpush1.bf16.xpose.msra.mxu0 0
        %1020 = vmatprep.subr.bf16.mxu0 0
        %1021 = vmatpush1.bf16.xpose.msra.mxu0 0
        %1022 = vmatprep.mubr.bf16.mxu0 0
        %1023 = vmatmul.mubr.bf16.gmra.mrb[0].mxu0 %v985
        %v1024 = vpop.f32.mrb[0].mxu0
        %v1025 = vadd.f32 0.0, %v1024
        %v1026 = vpop.f32.mrb[0].mxu0
        %v1027 = vpop.f32.mrb[0].mxu0
        %v1028 = vpop.f32.mrb[0].mxu0
        %1029 = vdwg.mxu0
        %v1030 = vmul.f32 %v1025, 0.35355338
        %v1031 = vsel %vm866, %v1030, -inf
        %1032 = vmax.xlane.f32.xlu0 %v1031
        %v1033 = vpop.xlane.xlu0 %1032
        %v1034 = vsub.f32 %v1030, %v1033
        %v1035 = vmul.f32 %v1034, 1.442695
        %v1036 = vpow.pop %v1035
        %v1037 = vsel %vm866, %v1036, 0.0
        %1038 = vadd.xlane.f32.xlu0 %v1037
        %v1039 = vpop.xlane.xlu0 %1038
        %v1040 = vrcp.pop %v1039
        %v1041 = vmul.f32 1.0, %v1040
        %v1042 = vmul.f32 %v1036, %v1041
        %v1043 = vadd.f32 %v926, %v1042
        %v1044 = vpack.c.bf16 %v1042, %v1042
        %1045 = vrot.lane.b32.xlu0 %v862, 56
        %v1046 = vpop.permute.xlu0 %1045
        %v1048 = vsel %vm866, %v1044, 0
        %v1051 = vsel %vm933, %v1046, 0
        %1053 = vmatprep.subr.bf16.mxu0 0
        %1054 = vmatpush1.bf16.msra.mxu0 %v1051
        %1055 = vmatprep.subr.bf16.mxu0 0
        %1056 = vmatpush1.bf16.msra.mxu0 0
        %1057 = vmatprep.subr.bf16.mxu0 0
        %1058 = vmatpush1.bf16.msra.mxu0 0
        %1059 = vmatprep.subr.bf16.mxu0 0
        %1060 = vmatpush1.bf16.msra.mxu0 0
        %1061 = vmatprep.subr.bf16.mxu0 0
        %1062 = vmatpush1.bf16.msra.mxu0 0
        %1063 = vmatprep.subr.bf16.mxu0 0
        %1064 = vmatpush1.bf16.msra.mxu0 0
        %1065 = vmatprep.subr.bf16.mxu0 0
        %1066 = vmatpush1.bf16.msra.mxu0 0
        %1067 = vmatprep.subr.bf16.mxu0 0
        %1068 = vmatpush1.bf16.msra.mxu0 0
        %1069 = vmatprep.subr.bf16.mxu0 0
        %1070 = vmatpush1.bf16.msra.mxu0 0
        %1071 = vmatprep.subr.bf16.mxu0 0
        %1072 = vmatpush1.bf16.msra.mxu0 0
        %1073 = vmatprep.subr.bf16.mxu0 0
        %1074 = vmatpush1.bf16.msra.mxu0 0
        %1075 = vmatprep.subr.bf16.mxu0 0
        %1076 = vmatpush1.bf16.msra.mxu0 0
        %1077 = vmatprep.subr.bf16.mxu0 0
        %1078 = vmatpush1.bf16.msra.mxu0 0
        %1079 = vmatprep.subr.bf16.mxu0 0
        %1080 = vmatpush1.bf16.msra.mxu0 0
        %1081 = vmatprep.subr.bf16.mxu0 0
        %1082 = vmatpush1.bf16.msra.mxu0 0
        %1083 = vmatprep.subr.bf16.mxu0 0
        %1084 = vmatpush1.bf16.msra.mxu0 0
        %1085 = vmatprep.mubr.bf16.mxu0 0
        %1086 = vmatmul.mubr.bf16.gmra.mrb[0].mxu0 %v1048
        %v1087 = vpop.f32.mrb[0].mxu0
        %v1088 = vadd.f32 0.0, %v1087
        %v1089 = vpop.f32.mrb[0].mxu0
        %v1090 = vpop.f32.mrb[0].mxu0
        %v1091 = vpop.f32.mrb[0].mxu0
        %1092 = vdwg.mxu0
        %v1093 = vpack.c.bf16 %v1088, %v1088
        %v1095 = vunpack.c.l.b16 %v1093
        %v1096 = vpack.c.b16 %v1095, %v1095
        %1097 = vrot.lane.b32.xlu0 %v1096, 8
        %v1098 = vpop.permute.xlu0 %1097
        %vm1100 = vcmask 126016
        %1101 = vst.msk [vmem:[#allocation3] sm:$0xf] %vm1100, %v1098
        %1102 = vrot.lane.b32.xlu0 %v862, 112
        %v1103 = vpop.permute.xlu0 %1102
        %1104 = vrot.lane.b32.xlu0 %v862, 80
        %v1105 = vpop.permute.xlu0 %1104
        %v1107 = vsel %vm866, %v1103, 0
        %v1110 = vsel %vm866, %v1105, 0
        %1112 = vmatprep.subr.bf16.mxu0 0
        %1113 = vmatpush1.bf16.xpose.msra.mxu0 %v1110
        %1114 = vmatprep.subr.bf16.mxu0 0
        %1115 = vmatpush1.bf16.xpose.msra.mxu0 0
        %1116 = vmatprep.subr.bf16.mxu0 0
        %1117 = vmatpush1.bf16.xpose.msra.mxu0 0
        %1118 = vmatprep.subr.bf16.mxu0 0
        %1119 = vmatpush1.bf16.xpose.msra.mxu0 0
        %1120 = vmatprep.subr.bf16.mxu0 0
        %1121 = vmatpush1.bf16.xpose.msra.mxu0 0
        %1122 = vmatprep.subr.bf16.mxu0 0
        %1123 = vmatpush1.bf16.xpose.msra.mxu0 0
        %1124 = vmatprep.subr.bf16.mxu0 0
        %1125 = vmatpush1.bf16.xpose.msra.mxu0 0
        %1126 = vmatprep.subr.bf16.mxu0 0
        %1127 = vmatpush1.bf16.xpose.msra.mxu0 0
        %1128 = vmatprep.subr.bf16.mxu0 0
        %1129 = vmatpush1.bf16.xpose.msra.mxu0 0
        %1130 = vmatprep.subr.bf16.mxu0 0
        %1131 = vmatpush1.bf16.xpose.msra.mxu0 0
        %1132 = vmatprep.subr.bf16.mxu0 0
        %1133 = vmatpush1.bf16.xpose.msra.mxu0 0
        %1134 = vmatprep.subr.bf16.mxu0 0
        %1135 = vmatpush1.bf16.xpose.msra.mxu0 0
        %1136 = vmatprep.subr.bf16.mxu0 0
        %1137 = vmatpush1.bf16.xpose.msra.mxu0 0
        %1138 = vmatprep.subr.bf16.mxu0 0
        %1139 = vmatpush1.bf16.xpose.msra.mxu0 0
        %1140 = vmatprep.subr.bf16.mxu0 0
        %1141 = vmatpush1.bf16.xpose.msra.mxu0 0
        %1142 = vmatprep.subr.bf16.mxu0 0
        %1143 = vmatpush1.bf16.xpose.msra.mxu0 0
        %1144 = vmatprep.mubr.bf16.mxu0 0
        %1145 = vmatmul.mubr.bf16.gmra.mrb[0].mxu0 %v1107
        %v1146 = vpop.f32.mrb[0].mxu0
        %v1147 = vadd.f32 0.0, %v1146
        %v1148 = vpop.f32.mrb[0].mxu0
        %v1149 = vpop.f32.mrb[0].mxu0
        %v1150 = vpop.f32.mrb[0].mxu0
        %1151 = vdwg.mxu0
        %v1152 = vmul.f32 %v1147, 0.35355338
        %v1153 = vsel %vm866, %v1152, -inf
        %1154 = vmax.xlane.f32.xlu0 %v1153
        %v1155 = vpop.xlane.xlu0 %1154
        %v1156 = vsub.f32 %v1152, %v1155
        %v1157 = vmul.f32 %v1156, 1.442695
        %v1158 = vpow.pop %v1157
        %v1159 = vsel %vm866, %v1158, 0.0
        %1160 = vadd.xlane.f32.xlu0 %v1159
        %v1161 = vpop.xlane.xlu0 %1160
        %v1162 = vrcp.pop %v1161
        %v1163 = vmul.f32 1.0, %v1162
        %v1164 = vmul.f32 %v1158, %v1163
        %v1165 = vadd.f32 %v1043, %v1164
        %v1166 = vpack.c.bf16 %v1164, %v1164
        %1167 = vrot.lane.b32.xlu0 %v862, 48
        %v1168 = vpop.permute.xlu0 %1167
        %v1170 = vsel %vm866, %v1166, 0
        %v1173 = vsel %vm933, %v1168, 0
        %1175 = vmatprep.subr.bf16.mxu0 0
        %1176 = vmatpush1.bf16.msra.mxu0 %v1173
        %1177 = vmatprep.subr.bf16.mxu0 0
        %1178 = vmatpush1.bf16.msra.mxu0 0
        %1179 = vmatprep.subr.bf16.mxu0 0
        %1180 = vmatpush1.bf16.msra.mxu0 0
        %1181 = vmatprep.subr.bf16.mxu0 0
        %1182 = vmatpush1.bf16.msra.mxu0 0
        %1183 = vmatprep.subr.bf16.mxu0 0
        %1184 = vmatpush1.bf16.msra.mxu0 0
        %1185 = vmatprep.subr.bf16.mxu0 0
        %1186 = vmatpush1.bf16.msra.mxu0 0
        %1187 = vmatprep.subr.bf16.mxu0 0
        %1188 = vmatpush1.bf16.msra.mxu0 0
        %1189 = vmatprep.subr.bf16.mxu0 0
        %1190 = vmatpush1.bf16.msra.mxu0 0
        %1191 = vmatprep.subr.bf16.mxu0 0
        %1192 = vmatpush1.bf16.msra.mxu0 0
        %1193 = vmatprep.subr.bf16.mxu0 0
        %1194 = vmatpush1.bf16.msra.mxu0 0
        %1195 = vmatprep.subr.bf16.mxu0 0
        %1196 = vmatpush1.bf16.msra.mxu0 0
        %1197 = vmatprep.subr.bf16.mxu0 0
        %1198 = vmatpush1.bf16.msra.mxu0 0
        %1199 = vmatprep.subr.bf16.mxu0 0
        %1200 = vmatpush1.bf16.msra.mxu0 0
        %1201 = vmatprep.subr.bf16.mxu0 0
        %1202 = vmatpush1.bf16.msra.mxu0 0
        %1203 = vmatprep.subr.bf16.mxu0 0
        %1204 = vmatpush1.bf16.msra.mxu0 0
        %1205 = vmatprep.subr.bf16.mxu0 0
        %1206 = vmatpush1.bf16.msra.mxu0 0
        %1207 = vmatprep.mubr.bf16.mxu0 0
        %1208 = vmatmul.mubr.bf16.gmra.mrb[0].mxu0 %v1170
        %v1209 = vpop.f32.mrb[0].mxu0
        %v1210 = vadd.f32 0.0, %v1209
        %v1211 = vpop.f32.mrb[0].mxu0
        %v1212 = vpop.f32.mrb[0].mxu0
        %v1213 = vpop.f32.mrb[0].mxu0
        %1214 = vdwg.mxu0
        %v1215 = vpack.c.bf16 %v1210, %v1210
        %v1217 = vunpack.c.l.b16 %v1215
        %v1218 = vpack.c.b16 %v1217, %v1217
        %1219 = vrot.lane.b32.xlu0 %v1218, 16
        %v1220 = vpop.permute.xlu0 %1219
        %vm1222 = vcmask 191616
        %1223 = vst.msk [vmem:[#allocation3] sm:$0xf] %vm1222, %v1220
        %1224 = vrot.lane.b32.xlu0 %v862, 104
        %v1225 = vpop.permute.xlu0 %1224
        %1226 = vrot.lane.b32.xlu0 %v862, 72
        %v1227 = vpop.permute.xlu0 %1226
        %v1229 = vsel %vm866, %v1225, 0
        %v1232 = vsel %vm866, %v1227, 0
        %1234 = vmatprep.subr.bf16.mxu0 0
        %1235 = vmatpush1.bf16.xpose.msra.mxu0 %v1232
        %1236 = vmatprep.subr.bf16.mxu0 0
        %1237 = vmatpush1.bf16.xpose.msra.mxu0 0
        %1238 = vmatprep.subr.bf16.mxu0 0
        %1239 = vmatpush1.bf16.xpose.msra.mxu0 0
        %1240 = vmatprep.subr.bf16.mxu0 0
        %1241 = vmatpush1.bf16.xpose.msra.mxu0 0
        %1242 = vmatprep.subr.bf16.mxu0 0
        %1243 = vmatpush1.bf16.xpose.msra.mxu0 0
        %1244 = vmatprep.subr.bf16.mxu0 0
        %1245 = vmatpush1.bf16.xpose.msra.mxu0 0
        %1246 = vmatprep.subr.bf16.mxu0 0
        %1247 = vmatpush1.bf16.xpose.msra.mxu0 0
        %1248 = vmatprep.subr.bf16.mxu0 0
        %1249 = vmatpush1.bf16.xpose.msra.mxu0 0
        %1250 = vmatprep.subr.bf16.mxu0 0
        %1251 = vmatpush1.bf16.xpose.msra.mxu0 0
        %1252 = vmatprep.subr.bf16.mxu0 0
        %1253 = vmatpush1.bf16.xpose.msra.mxu0 0
        %1254 = vmatprep.subr.bf16.mxu0 0
        %1255 = vmatpush1.bf16.xpose.msra.mxu0 0
        %1256 = vmatprep.subr.bf16.mxu0 0
        %1257 = vmatpush1.bf16.xpose.msra.mxu0 0
        %1258 = vmatprep.subr.bf16.mxu0 0
        %1259 = vmatpush1.bf16.xpose.msra.mxu0 0
        %1260 = vmatprep.subr.bf16.mxu0 0
        %1261 = vmatpush1.bf16.xpose.msra.mxu0 0
        %1262 = vmatprep.subr.bf16.mxu0 0
        %1263 = vmatpush1.bf16.xpose.msra.mxu0 0
        %1264 = vmatprep.subr.bf16.mxu0 0
        %1265 = vmatpush1.bf16.xpose.msra.mxu0 0
        %1266 = vmatprep.mubr.bf16.mxu0 0
        %1267 = vmatmul.mubr.bf16.gmra.mrb[0].mxu0 %v1229
        %v1268 = vpop.f32.mrb[0].mxu0
        %v1269 = vadd.f32 0.0, %v1268
        %v1270 = vpop.f32.mrb[0].mxu0
        %v1271 = vpop.f32.mrb[0].mxu0
        %v1272 = vpop.f32.mrb[0].mxu0
        %1273 = vdwg.mxu0
        %v1274 = vmul.f32 %v1269, 0.35355338
        %v1275 = vsel %vm866, %v1274, -inf
        %1276 = vmax.xlane.f32.xlu0 %v1275
        %v1277 = vpop.xlane.xlu0 %1276
        %v1278 = vsub.f32 %v1274, %v1277
        %v1279 = vmul.f32 %v1278, 1.442695
        %v1280 = vpow.pop %v1279
        %v1281 = vsel %vm866, %v1280, 0.0
        %1282 = vadd.xlane.f32.xlu0 %v1281
        %v1283 = vpop.xlane.xlu0 %1282
        %v1284 = vrcp.pop %v1283
        %v1285 = vmul.f32 1.0, %v1284
        %v1286 = vmul.f32 %v1280, %v1285
        %v1287 = vadd.f32 %v1165, %v1286
        %v1288 = vpack.c.bf16 %v1286, %v1286
        %1289 = vrot.lane.b32.xlu0 %v862, 40
        %v1290 = vpop.permute.xlu0 %1289
        %v1292 = vsel %vm866, %v1288, 0
        %v1295 = vsel %vm933, %v1290, 0
        %1297 = vmatprep.subr.bf16.mxu0 0
        %1298 = vmatpush1.bf16.msra.mxu0 %v1295
        %1299 = vmatprep.subr.bf16.mxu0 0
        %1300 = vmatpush1.bf16.msra.mxu0 0
        %1301 = vmatprep.subr.bf16.mxu0 0
        %1302 = vmatpush1.bf16.msra.mxu0 0
        %1303 = vmatprep.subr.bf16.mxu0 0
        %1304 = vmatpush1.bf16.msra.mxu0 0
        %1305 = vmatprep.subr.bf16.mxu0 0
        %1306 = vmatpush1.bf16.msra.mxu0 0
        %1307 = vmatprep.subr.bf16.mxu0 0
        %1308 = vmatpush1.bf16.msra.mxu0 0
        %1309 = vmatprep.subr.bf16.mxu0 0
        %1310 = vmatpush1.bf16.msra.mxu0 0
        %1311 = vmatprep.subr.bf16.mxu0 0
        %1312 = vmatpush1.bf16.msra.mxu0 0
        %1313 = vmatprep.subr.bf16.mxu0 0
        %1314 = vmatpush1.bf16.msra.mxu0 0
        %1315 = vmatprep.subr.bf16.mxu0 0
        %1316 = vmatpush1.bf16.msra.mxu0 0
        %1317 = vmatprep.subr.bf16.mxu0 0
        %1318 = vmatpush1.bf16.msra.mxu0 0
        %1319 = vmatprep.subr.bf16.mxu0 0
        %1320 = vmatpush1.bf16.msra.mxu0 0
        %1321 = vmatprep.subr.bf16.mxu0 0
        %1322 = vmatpush1.bf16.msra.mxu0 0
        %1323 = vmatprep.subr.bf16.mxu0 0
        %1324 = vmatpush1.bf16.msra.mxu0 0
        %1325 = vmatprep.subr.bf16.mxu0 0
        %1326 = vmatpush1.bf16.msra.mxu0 0
        %1327 = vmatprep.subr.bf16.mxu0 0
        %1328 = vmatpush1.bf16.msra.mxu0 0
        %1329 = vmatprep.mubr.bf16.mxu0 0
        %1330 = vmatmul.mubr.bf16.gmra.mrb[0].mxu0 %v1292
        %v1331 = vpop.f32.mrb[0].mxu0
        %v1332 = vadd.f32 0.0, %v1331
        %v1333 = vpop.f32.mrb[0].mxu0
        %v1334 = vpop.f32.mrb[0].mxu0
        %v1335 = vpop.f32.mrb[0].mxu0
        %1336 = vdwg.mxu0
        %v1337 = vpack.c.bf16 %v1332, %v1332
        %v1339 = vunpack.c.l.b16 %v1337
        %v1340 = vpack.c.b16 %v1339, %v1339
        %1341 = vrot.lane.b32.xlu0 %v1340, 24
        %v1342 = vpop.permute.xlu0 %1341
        %vm1344 = vcmask 257216
        %1345 = vst.msk [vmem:[#allocation3] sm:$0xf] %vm1344, %v1342
        %v1346 = vld [vmem:[#allocation3] sm:$0xf]
        %v1347 = vld [vmem:[%s738] sm:$0xf]
        %v1348 = vld [vmem:[%s738 + $0x4] sm:$0xf]
        %v1349 = vld [vmem:[%s738 + $0x8] sm:$0xf]
        %v1350 = vld [vmem:[%s738 + $0xc] sm:$0xf]
        %v1351 = vld [vmem:[%s741] sm:$0x1]
        %v1353 = vlaneseq
        %v1354 = vshrl.u32 %v1353, 7
        %v1355 = vsub.s32 0, %v1354
        %v1356 = vrot.slane %v1351, %v1355
        %v1362 = vunpack.c.l.b16 %v1347
        %v1363 = vunpack.c.l.b16 %v1348
        %v1364 = vunpack.c.l.b16 %v1349
        %v1365 = vunpack.c.l.b16 %v1350
        %v1366 = vpack.c.b16 %v1363, %v1362
        %v1367 = vpack.c.b16 %v1365, %v1364
        %v1371 = vsel %vm766, %v1346, 0
        %1373 = vmatprep.subr.bf16.mxu0 0
        %1374 = vmatpush1.bf16.msra.mxu0 %v1366
        %1375 = vmatprep.subr.bf16.mxu0 0
        %1376 = vmatpush1.bf16.msra.mxu0 %v1367
        %1377 = vmatprep.subr.bf16.mxu0 0
        %1378 = vmatpush1.bf16.msra.mxu0 0
        %1379 = vmatprep.subr.bf16.mxu0 0
        %1380 = vmatpush1.bf16.msra.mxu0 0
        %1381 = vmatprep.subr.bf16.mxu0 0
        %1382 = vmatpush1.bf16.msra.mxu0 0
        %1383 = vmatprep.subr.bf16.mxu0 0
        %1384 = vmatpush1.bf16.msra.mxu0 0
        %1385 = vmatprep.subr.bf16.mxu0 0
        %1386 = vmatpush1.bf16.msra.mxu0 0
        %1387 = vmatprep.subr.bf16.mxu0 0
        %1388 = vmatpush1.bf16.msra.mxu0 0
        %1389 = vmatprep.subr.bf16.mxu0 0
        %1390 = vmatpush1.bf16.msra.mxu0 0
        %1391 = vmatprep.subr.bf16.mxu0 0
        %1392 = vmatpush1.bf16.msra.mxu0 0
        %1393 = vmatprep.subr.bf16.mxu0 0
        %1394 = vmatpush1.bf16.msra.mxu0 0
        %1395 = vmatprep.subr.bf16.mxu0 0
        %1396 = vmatpush1.bf16.msra.mxu0 0
        %1397 = vmatprep.subr.bf16.mxu0 0
        %1398 = vmatpush1.bf16.msra.mxu0 0
        %1399 = vmatprep.subr.bf16.mxu0 0
        %1400 = vmatpush1.bf16.msra.mxu0 0
        %1401 = vmatprep.subr.bf16.mxu0 0
        %1402 = vmatpush1.bf16.msra.mxu0 0
        %1403 = vmatprep.subr.bf16.mxu0 0
        %1404 = vmatpush1.bf16.msra.mxu0 0
        %1405 = vmatprep.mubr.bf16.mxu0 0
        %1406 = vmatmul.mubr.bf16.gmra.mrb[0].mxu0 %v1371
        %v1407 = vpop.f32.mrb[0].mxu0
        %v1408 = vadd.f32 %v1356, %v1407
        %v1409 = vpop.f32.mrb[0].mxu0
        %v1410 = vpop.f32.mrb[0].mxu0
        %v1411 = vpop.f32.mrb[0].mxu0
        %1412 = vdwg.mxu0
        %v1413 = vadd.f32 %v763, %v1408
        %v1414 = vld [vmem:[%s607] sm:$0x1]
        %v1415 = vld [vmem:[%s615] sm:$0x1]
        %v1416 = vsel %vm766, %v1413, 0.0
        %1417 = vadd.xlane.f32.xlu0 %v1416
        %v1418 = vpop.xlane.xlu0 %1417
        %v1419 = vmul.f32 %v1418, %v770
        %v1420 = vsub.f32 %v1413, %v1419
        %v1421 = vmul.f32 %v1420, %v1420
        %v1422 = vsel %vm766, %v1421, 0.0
        %1423 = vadd.xlane.f32.xlu0 %v1422
        %v1424 = vpop.xlane.xlu0 %1423
        %v1425 = vmul.f32 %v1424, %v770
        %v1426 = vadd.f32 %v1425, 1e-05
        %v1427 = vrsqrt.pop %v1426
        %v1428 = vmul.f32 %v1420, %v1427
        %v1430 = vlaneseq
        %v1431 = vshrl.u32 %v1430, 7
        %v1432 = vsub.s32 0, %v1431
        %v1433 = vrot.slane %v1414, %v1432
        %v1435 = vmul.f32 %v1428, %v1433
        %v1437 = vlaneseq
        %v1438 = vshrl.u32 %v1437, 7
        %v1439 = vsub.s32 0, %v1438
        %v1440 = vrot.slane %v1415, %v1439
        %v1442 = vadd.f32 %v1435, %v1440
        %v1443 = vpack.c.bf16 %v1442, %v1442
        %v1444 = vld [vmem:[%s746] sm:$0xf]
        %v1445 = vld [vmem:[%s746 + $0x4] sm:$0xf]
        %v1446 = vld [vmem:[%s746 + $0x8] sm:$0xf]
        %v1447 = vld [vmem:[%s746 + $0xc] sm:$0xf]
        %v1448 = vld [vmem:[%s623] sm:$0x1]
        %v1450 = vlaneseq
        %v1451 = vshrl.u32 %v1450, 7
        %v1452 = vsub.s32 0, %v1451
        %v1453 = vrot.slane %v1448, %v1452
        %v1459 = vunpack.c.l.b16 %v1444
        %v1460 = vunpack.c.l.b16 %v1445
        %v1461 = vunpack.c.l.b16 %v1446
        %v1462 = vunpack.c.l.b16 %v1447
        %v1463 = vpack.c.b16 %v1460, %v1459
        %v1464 = vpack.c.b16 %v1462, %v1461
        %v1468 = vsel %vm766, %v1443, 0
        %1470 = vmatprep.subr.bf16.mxu0 0
        %1471 = vmatpush1.bf16.msra.mxu0 %v1463
        %1472 = vmatprep.subr.bf16.mxu0 0
        %1473 = vmatpush1.bf16.msra.mxu0 %v1464
        %1474 = vmatprep.subr.bf16.mxu0 0
        %1475 = vmatpush1.bf16.msra.mxu0 0
        %1476 = vmatprep.subr.bf16.mxu0 0
        %1477 = vmatpush1.bf16.msra.mxu0 0
        %1478 = vmatprep.subr.bf16.mxu0 0
        %1479 = vmatpush1.bf16.msra.mxu0 0
        %1480 = vmatprep.subr.bf16.mxu0 0
        %1481 = vmatpush1.bf16.msra.mxu0 0
        %1482 = vmatprep.subr.bf16.mxu0 0
        %1483 = vmatpush1.bf16.msra.mxu0 0
        %1484 = vmatprep.subr.bf16.mxu0 0
        %1485 = vmatpush1.bf16.msra.mxu0 0
        %1486 = vmatprep.subr.bf16.mxu0 0
        %1487 = vmatpush1.bf16.msra.mxu0 0
        %1488 = vmatprep.subr.bf16.mxu0 0
        %1489 = vmatpush1.bf16.msra.mxu0 0
        %1490 = vmatprep.subr.bf16.mxu0 0
        %1491 = vmatpush1.bf16.msra.mxu0 0
        %1492 = vmatprep.subr.bf16.mxu0 0
        %1493 = vmatpush1.bf16.msra.mxu0 0
        %1494 = vmatprep.subr.bf16.mxu0 0
        %1495 = vmatpush1.bf16.msra.mxu0 0
        %1496 = vmatprep.subr.bf16.mxu0 0
        %1497 = vmatpush1.bf16.msra.mxu0 0
        %1498 = vmatprep.subr.bf16.mxu0 0
        %1499 = vmatpush1.bf16.msra.mxu0 0
        %1500 = vmatprep.subr.bf16.mxu0 0
        %1501 = vmatpush1.bf16.msra.mxu0 0
        %1502 = vmatprep.mubr.bf16.mxu0 0
        %1503 = vmatmul.mubr.bf16.gmra.mrb[0].mxu0 %v1468
        %v1504 = vpop.f32.mrb[0].mxu0
        %v1505 = vadd.f32 %v1453, %v1504
        %v1506 = vpop.f32.mrb[0].mxu0
        %v1507 = vpop.f32.mrb[0].mxu0
        %v1508 = vpop.f32.mrb[0].mxu0
        %1509 = vdwg.mxu0
        %v1510 = vmax.f32 %v1505, 0.0
        %v1511 = vpack.c.bf16 %v1510, %v1510
        %v1512 = vld [vmem:[%s751] sm:$0xf]
        %v1513 = vld [vmem:[%s751 + $0x4] sm:$0xf]
        %v1514 = vld [vmem:[%s751 + $0x8] sm:$0xf]
        %v1515 = vld [vmem:[%s751 + $0xc] sm:$0xf]
        %v1516 = vld [vmem:[%s751 + $0x10] sm:$0xf]
        %v1517 = vld [vmem:[%s751 + $0x14] sm:$0xf]
        %v1518 = vld [vmem:[%s751 + $0x18] sm:$0xf]
        %v1519 = vld [vmem:[%s751 + $0x1c] sm:$0xf]
        %v1520 = vld [vmem:[%s754] sm:$0x1]
        %v1522 = vlaneseq
        %v1523 = vshrl.u32 %v1522, 7
        %v1524 = vsub.s32 0, %v1523
        %v1525 = vrot.slane %v1520, %v1524
        %v1535 = vunpack.c.l.b16 %v1512
        %v1536 = vunpack.c.l.b16 %v1513
        %v1537 = vunpack.c.l.b16 %v1514
        %v1538 = vunpack.c.l.b16 %v1515
        %v1539 = vunpack.c.l.b16 %v1516
        %v1540 = vunpack.c.l.b16 %v1517
        %v1541 = vunpack.c.l.b16 %v1518
        %v1542 = vunpack.c.l.b16 %v1519
        %v1543 = vpack.c.b16 %v1536, %v1535
        %v1544 = vpack.c.b16 %v1538, %v1537
        %v1545 = vpack.c.b16 %v1540, %v1539
        %v1546 = vpack.c.b16 %v1542, %v1541
        %vm1551 = vcmask 523264
        %v1553 = vsel %vm1551, %v1511, 0
        %1555 = vmatprep.subr.bf16.mxu0 0
        %1556 = vmatpush1.bf16.msra.mxu0 %v1543
        %1557 = vmatprep.subr.bf16.mxu0 0
        %1558 = vmatpush1.bf16.msra.mxu0 %v1544
        %1559 = vmatprep.subr.bf16.mxu0 0
        %1560 = vmatpush1.bf16.msra.mxu0 %v1545
        %1561 = vmatprep.subr.bf16.mxu0 0
        %1562 = vmatpush1.bf16.msra.mxu0 %v1546
        %1563 = vmatprep.subr.bf16.mxu0 0
        %1564 = vmatpush1.bf16.msra.mxu0 0
        %1565 = vmatprep.subr.bf16.mxu0 0
        %1566 = vmatpush1.bf16.msra.mxu0 0
        %1567 = vmatprep.subr.bf16.mxu0 0
        %1568 = vmatpush1.bf16.msra.mxu0 0
        %1569 = vmatprep.subr.bf16.mxu0 0
        %1570 = vmatpush1.bf16.msra.mxu0 0
        %1571 = vmatprep.subr.bf16.mxu0 0
        %1572 = vmatpush1.bf16.msra.mxu0 0
        %1573 = vmatprep.subr.bf16.mxu0 0
        %1574 = vmatpush1.bf16.msra.mxu0 0
        %1575 = vmatprep.subr.bf16.mxu0 0
        %1576 = vmatpush1.bf16.msra.mxu0 0
        %1577 = vmatprep.subr.bf16.mxu0 0
        %1578 = vmatpush1.bf16.msra.mxu0 0
        %1579 = vmatprep.subr.bf16.mxu0 0
        %1580 = vmatpush1.bf16.msra.mxu0 0
        %1581 = vmatprep.subr.bf16.mxu0 0
        %1582 = vmatpush1.bf16.msra.mxu0 0
        %1583 = vmatprep.subr.bf16.mxu0 0
        %1584 = vmatpush1.bf16.msra.mxu0 0
        %1585 = vmatprep.subr.bf16.mxu0 0
        %1586 = vmatpush1.bf16.msra.mxu0 0
        %1587 = vmatprep.mubr.bf16.mxu0 0
        %1588 = vmatmul.mubr.bf16.gmra.mrb[0].mxu0 %v1553
        %v1589 = vpop.f32.mrb[0].mxu0
        %v1590 = vadd.f32 %v1525, %v1589
        %v1591 = vpop.f32.mrb[0].mxu0
        %v1592 = vpop.f32.mrb[0].mxu0
        %v1593 = vpop.f32.mrb[0].mxu0
        %1594 = vdwg.mxu0
        %v1595 = vadd.f32 %v1413, %v1590
        %1596 = vst.msk [vmem:[#allocation2] sm:$0xff] %vm766, %v1595
        %p1597 = scmp.eq.s32.totalorder %s46, 1
        // Predicated region
        $region93: #{tpu_custom_call.1} parent=71 // pred_check
          %p1598 = pneg %p1597
        $region94: #{tpu_custom_call.1} parent=71 // pred_check_branch
          %1600 = sbr.rel (%p1598) target = $region96
        $region95: #{tpu_custom_call.1} parent=71 // pred_region
          %1601 = vst.msk [vmem:[%s712] sm:$0xff] %vm766, %v1595
          %v1602 = vmul.f32 %v1287, 0.25
          %1603 = vst.msk [vmem:[%s719] sm:$0xff] %vm866, %v1602
        $region96: #{tpu_custom_call.1} parent=71 // pred_fallthru
          _
        %s1604 = sand.u32 %s399, 1
        %s1605 = scalar_lea.sflag [#allocation6], %s1604
        %s1606 = sand.u32 %s399, 1
        %s1607 = smul.addr %s1606, 8
        %s1608 = scalar_lea.vmem [#allocation12], %s1607
        %s1609 = sand.u32 %s425, 1
        %s1610 = scalar_lea.sflag [#allocation14], %s1609
        %s1611 = sand.u32 %s425, 1
        %s1612 = smul.addr %s1611, 8
        %s1613 = scalar_lea.vmem [#allocation13], %s1612
        // Predicated region
        $region97: #{tpu_custom_call.1} parent=71 // pred_check
          %p1614 = pneg %p409
        $region98: #{tpu_custom_call.1} parent=71 // pred_check_branch
          %1616 = sbr.rel (%p1614) target = $region100
        $region99: #{tpu_custom_call.1} parent=71 // pred_region
          %s1618 = ssub.s32 128, 128
          %1619 = vsyncadd %s1605, %s1618
          %s1620 = smul.addr %s45, 128
          %s1621 = scalar_lea.hbm %s13, %s1620
          %s1623 = sshll.u32 %s1608, 4
          %s1624 = int_to_ptr.vmem [resolvable:$true] %s1623
          %1626 = dma.vmem_to_hbm [thread:$0]  %s1624, 128, %s1621, %s1605
        $region100: #{tpu_custom_call.1} parent=71 // pred_fallthru
          _
        // Predicated region
        $region101: #{tpu_custom_call.1} parent=71 // pred_check
          %p1627 = pneg %p435
        $region102: #{tpu_custom_call.1} parent=71 // pred_check_branch
          %1629 = sbr.rel (%p1627) target = $region104
        $region103: #{tpu_custom_call.1} parent=71 // pred_region
          %s1631 = ssub.s32 128, 128
          %1632 = vsyncadd %s1610, %s1631
          %s1633 = smul.addr %s45, 128
          %s1634 = scalar_lea.hbm %s14, %s1633
          %s1636 = sshll.u32 %s1613, 4
          %s1637 = int_to_ptr.vmem [resolvable:$true] %s1636
          %1639 = dma.vmem_to_hbm [thread:$0]  %s1637, 128, %s1634, %s1610
        $region104: #{tpu_custom_call.1} parent=71 // pred_fallthru
          _
      $region72: #{tpu_custom_call.1} parent=5 // pred_fallthru
        _
      %p1640 = scmp.le.s32.totalorder 2, %s36
      // Predicated region
      $region105: #{tpu_custom_call.1} parent=5 // pred_check
        %p1641 = pneg %p1640
      $region106: #{tpu_custom_call.1} parent=5 // pred_check_branch
        %1643 = sbr.rel (%p1641) target = $region108
      $region107: #{tpu_custom_call.1} parent=5 // pred_region
        %s1644 = ssub.s32 %s36, 2
        // Predicated region
        $region109: #{tpu_custom_call.1} parent=107 // pred_check
          %p1645 = pneg %p415
        $region110: #{tpu_custom_call.1} parent=107 // pred_check_branch
          %1647 = sbr.rel (%p1645) target = $region112
        $region111: #{tpu_custom_call.1} parent=107 // pred_region
          %s1648 = sand.u32 %s400, 1
          %s1649 = scalar_lea.sflag [#allocation6], %s1648
          %s1650 = sand.u32 %s400, 1
          %s1651 = smul.addr %s1650, 8
          %s1652 = scalar_lea.vmem [#allocation12], %s1651
          %1653 = dma.done %s1649, 128
        $region112: #{tpu_custom_call.1} parent=107 // pred_fallthru
          _
        // Predicated region
        $region113: #{tpu_custom_call.1} parent=107 // pred_check
          %p1654 = pneg %p441
        $region114: #{tpu_custom_call.1} parent=107 // pred_check_branch
          %1656 = sbr.rel (%p1654) target = $region116
        $region115: #{tpu_custom_call.1} parent=107 // pred_region
          %s1657 = sand.u32 %s426, 1
          %s1658 = scalar_lea.sflag [#allocation14], %s1657
          %s1659 = sand.u32 %s426, 1
          %s1660 = smul.addr %s1659, 8
          %s1661 = scalar_lea.vmem [#allocation13], %s1660
          %1662 = dma.done %s1658, 128
        $region116: #{tpu_custom_call.1} parent=107 // pred_fallthru
          _
      $region108: #{tpu_custom_call.1} parent=5 // pred_fallthru
        _
    $region6: #{tpu_custom_call.1} parent=1 // loop_footer
      %s40 = sadd.s32 1, %s36
    $region7: #{tpu_custom_call.1} parent=1 // loop_footer_branch
      %35 = sbr.rel target = $region3
    $region8: #{tpu_custom_call.1} parent=1 // loop_exit
      _
    %1663 = vsyncpa [#allocation5], 1
    %s1664 = scalar_lea.sflag [#allocation5], 1
    %1665 = vsyncpa %s1664, 1
    %1666 = vsyncpa [#allocation8], 1
    %s1667 = scalar_lea.sflag [#allocation8], 1
    %1668 = vsyncpa %s1667, 1
    %1669 = vsyncpa [#allocation11], 1
    %s1670 = scalar_lea.sflag [#allocation11], 1
    %1671 = vsyncpa %s1670, 1
    %1672 = vsyncpa [#allocation6], 1
    %s1673 = scalar_lea.sflag [#allocation6], 1
    %1674 = vsyncpa %s1673, 1
    %1675 = vsyncpa [#allocation14], 1
    %s1676 = scalar_lea.sflag [#allocation14], 1
    %1677 = vsyncpa %s1676, 1

</llo_original>
